<compile_context>
chip_gen: v7x
topology: tpu7x:2x2x1
jax: 0.10.0
libtpu: 0.0.40
codegen_flags: <defaults>
</compile_context>

<pallas_src>
import numpy as np
import jax
import jax.numpy as jnp
from jax.experimental import pallas as pl
from jax.experimental.pallas import tpu as pltpu


# ---------------------------------------------------------------------------
# In-kernel 3-multiply (Gauss) complex matmul helpers on real/imag f32 planes.
# ---------------------------------------------------------------------------
def _gauss_left(ar, ai, asum, xr, xi):
    """(Ar + i Ai) @ (Xr + i Xi) with asum = Ar + Ai precomputed.  3 MXU matmuls."""
    p1 = jnp.dot(ar, xr, preferred_element_type=jnp.float32)
    p2 = jnp.dot(ai, xi, preferred_element_type=jnp.float32)
    p3 = jnp.dot(asum, xr + xi, preferred_element_type=jnp.float32)
    return p1 - p2, p3 - p1 - p2


def _gauss_right(xr, xi, brt, bit, bst):
    """(Xr + i Xi) @ (Br + i Bi)^T given pre-transposed BrT, BiT, BsT=(Br+Bi)^T."""
    q1 = jnp.dot(xr, brt, preferred_element_type=jnp.float32)
    q2 = jnp.dot(xi, bit, preferred_element_type=jnp.float32)
    q3 = jnp.dot(xr + xi, bst, preferred_element_type=jnp.float32)
    return q1 - q2, q3 - q1 - q2


# ---------------------------------------------------------------------------
# Pallas kernel: grid = (B, C).  One grid step = one (batch, coil) pair.
# Coil-sum accumulates in VMEM scratch; output written at the last coil.
# ---------------------------------------------------------------------------
def dcgd_kernel(xr_ref, xi_ref, kr_ref, ki_ref, m_ref, sr_ref, si_ref,
                dh_ref, dwt_ref, out_ref, ur_ref, ui_ref):
    c = pl.program_id(1)
    last_c = pl.num_programs(1) - 1

    @pl.when(c == 0)
    def _():
        ur_ref[...] = jnp.zeros_like(ur_ref)
        ui_ref[...] = jnp.zeros_like(ui_ref)

    xr = xr_ref[0]                       # [H, W]
    xi = xi_ref[0]
    m = m_ref[0]                         # sampling mask (real)
    m2 = m * m

    # Centered DFT matrices (stacked: fwd_r, fwd_i, fwd_r+fwd_i, inv_r, inv_i, inv_r+inv_i).
    FHr, FHi, FHs = dh_ref[0], dh_ref[1], dh_ref[2]
    IHr, IHi, IHs = dh_ref[3], dh_ref[4], dh_ref[5]
    FWrT, FWiT, FWsT = dwt_ref[0], dwt_ref[1], dwt_ref[2]
    IWrT, IWiT, IWsT = dwt_ref[3], dwt_ref[4], dwt_ref[5]

    src = sr_ref[0, 0]                   # smap real  [H, W]
    sic = si_ref[0, 0]                   # smap imag  [H, W]

    # coil image = x_complex * smap
    cr = xr * src - xi * sic
    ci = xr * sic + xi * src

    # A: centered 2-D FFT (ortho) via Gauss DFT matmuls
    tr, ti = _gauss_left(FHr, FHi, FHs, cr, ci)
    kpr, kpi = _gauss_right(tr, ti, FWrT, FWiT, FWsT)

    # Reference mask chain ((k - kp*m) * m) * m fused as (k - kp*m) * m^2.
    dr = (kr_ref[0, 0] - kpr * m) * m2
    di = (ki_ref[0, 0] - kpi * m) * m2

    # AH: centered 2-D IFFT, conj(smap) combine, accumulate over coils
    tr, ti = _gauss_left(IHr, IHi, IHs, dr, di)
    imr, imi = _gauss_right(tr, ti, IWrT, IWiT, IWsT)

    ur_ref[...] += src * imr + sic * imi
    ui_ref[...] += src * imi - sic * imr

    @pl.when(c == last_c)
    def _():
        out_ref[0, 0] = xr + ur_ref[...]
        out_ref[0, 1] = xi + ui_ref[...]


# ---------------------------------------------------------------------------
# Glue: centered DFT matrices + pallas_call wrapper.
# ---------------------------------------------------------------------------
def _centered_dft_mats(n):
    eye = np.eye(n)
    fwd = np.fft.fftshift(
        np.fft.fft(np.fft.ifftshift(eye, axes=0), axis=0, norm="ortho"), axes=0)
    inv = np.fft.fftshift(
        np.fft.ifft(np.fft.ifftshift(eye, axes=0), axis=0, norm="ortho"), axes=0)
    return fwd, inv


def dcgd_pallas(x, sub_ksp, mask, smaps):
    B, C, H, W = sub_ksp.shape
    xr = x[..., 0].astype(jnp.float32)                  # [B, H, W]
    xi = x[..., 1].astype(jnp.float32)
    kr = jnp.real(sub_ksp).astype(jnp.float32)          # [B, C, H, W]
    ki = jnp.imag(sub_ksp).astype(jnp.float32)
    sr = jnp.real(smaps).astype(jnp.float32)
    si = jnp.imag(smaps).astype(jnp.float32)
    m = mask.astype(jnp.float32)                        # [B, H, W]

    fh, ih = _centered_dft_mats(H)
    fw, iw = _centered_dft_mats(W)
    # [6, H, H]: fwd_r, fwd_i, fwd_r+fwd_i, inv_r, inv_i, inv_r+inv_i (for Gauss 3-mult).
    dh = jnp.asarray(
        np.stack([fh.real, fh.imag, fh.real + fh.imag,
                  ih.real, ih.imag, ih.real + ih.imag]), dtype=jnp.float32)
    # [6, W, W]: same planes, pre-transposed for the right-side matmul.
    dwt = jnp.asarray(
        np.stack([fw.real.T, fw.imag.T, (fw.real + fw.imag).T,
                  iw.real.T, iw.imag.T, (iw.real + iw.imag).T]), dtype=jnp.float32)

    grid_spec = pltpu.PrefetchScalarGridSpec(
        num_scalar_prefetch=0,
        grid=(B, C),
        in_specs=[
            pl.BlockSpec((1, H, W), lambda b, c: (b, 0, 0)),        # xr  (resident across c)
            pl.BlockSpec((1, H, W), lambda b, c: (b, 0, 0)),        # xi
            pl.BlockSpec((1, 1, H, W), lambda b, c: (b, c, 0, 0)),  # ksp real  (per coil)
            pl.BlockSpec((1, 1, H, W), lambda b, c: (b, c, 0, 0)),  # ksp imag
            pl.BlockSpec((1, H, W), lambda b, c: (b, 0, 0)),        # mask
            pl.BlockSpec((1, 1, H, W), lambda b, c: (b, c, 0, 0)),  # smap real (per coil)
            pl.BlockSpec((1, 1, H, W), lambda b, c: (b, c, 0, 0)),  # smap imag
            pl.BlockSpec((6, H, H), lambda b, c: (0, 0, 0)),        # DFT mats (rows)
            pl.BlockSpec((6, W, W), lambda b, c: (0, 0, 0)),        # DFT mats (cols, transposed)
        ],
        out_specs=pl.BlockSpec((1, 2, H, W), lambda b, c: (b, 0, 0, 0)),
        scratch_shapes=[pltpu.VMEM((H, W), jnp.float32),            # coil-sum real
                        pltpu.VMEM((H, W), jnp.float32)],           # coil-sum imag
    )

    out = pl.pallas_call(
        dcgd_kernel,
        out_shape=jax.ShapeDtypeStruct((B, 2, H, W), jnp.float32),
        grid_spec=grid_spec,
        compiler_params=pltpu.CompilerParams(
            dimension_semantics=("parallel", "arbitrary")),
    )(xr, xi, kr, ki, m, sr, si, dh, dwt)

    # [B, 2, H, W] -> [B, H, W, 2] (torch.view_as_real convention).
    # Kept outside the kernel: a last-dim-2 output block would force masked partial stores.
    # TODO(synk): downstream consumers could take the planar [B,2,H,W] layout directly and
    # skip this extra HBM pass.
    return jnp.transpose(out, (0, 2, 3, 1))


# ---------------------------------------------------------------------------
# Pure-JAX reference (jnp.fft) for verification.
# ---------------------------------------------------------------------------
def _fft2c(x):
    axes = (-2, -1)
    return jnp.fft.fftshift(
        jnp.fft.fft2(jnp.fft.ifftshift(x, axes=axes), axes=axes, norm="ortho"), axes=axes)


def _ifft2c(x):
    axes = (-2, -1)
    return jnp.fft.fftshift(
        jnp.fft.ifft2(jnp.fft.ifftshift(x, axes=axes), axes=axes, norm="ortho"), axes=axes)


def dcgd_reference(x, sub_ksp, mask, smaps):
    xc = (x[..., 0] + 1j * x[..., 1]).astype(jnp.complex64)     # [B, H, W]
    coil = xc[:, None] * smaps                                   # [B, C, H, W]
    ksp_pred = _fft2c(coil) * mask[:, None]                      # A
    diff = (sub_ksp - ksp_pred) * mask[:, None]                  # complex_scale
    diff = diff * mask[:, None]                                  # AH masks again
    img = _ifft2c(diff)
    upd = jnp.sum(jnp.conj(smaps) * img, axis=1)                 # coil combine
    return x + jnp.stack([jnp.real(upd), jnp.imag(upd)], axis=-1)


if __name__ == "__main__":
    B, C, H, W = 2, 4, 16, 16
    key = jax.random.PRNGKey(0)
    k1, k2, k3, k4, k5, k6 = jax.random.split(key, 6)

    x = jax.random.normal(k1, (B, H, W, 2), dtype=jnp.float32)
    smaps = (jax.random.normal(k2, (B, C, H, W), dtype=jnp.float32)
             + 1j * jax.random.normal(k3, (B, C, H, W), dtype=jnp.float32)).astype(jnp.complex64)
    sub_ksp = (jax.random.normal(k4, (B, C, H, W), dtype=jnp.float32)
               + 1j * jax.random.normal(k5, (B, C, H, W), dtype=jnp.float32)).astype(jnp.complex64)
    mask = jax.random.bernoulli(k6, 0.5, (B, H, W)).astype(jnp.float32)

    out = jax.block_until_ready(dcgd_pallas(x, sub_ksp, mask, smaps))
    ref = dcgd_reference(x, sub_ksp, mask, smaps)

    assert out.shape == (B, H, W, 2) and out.dtype == jnp.float32
    max_err = float(jnp.max(jnp.abs(out - ref)))
    assert max_err < 1e-3, f"mismatch vs reference: {max_err}"
    print("KERNEL_OK")
</pallas_src>

<mosaic_0001>
module attributes {stable_mosaic.version = 11 : i64} {
  func.func @dcgd_kernel(%arg0: i32, %arg1: i32, %arg2: memref<1x16x16xf32, #tpu.memory_space<vmem>>, %arg3: memref<1x16x16xf32, #tpu.memory_space<vmem>>, %arg4: memref<1x1x16x16xf32, #tpu.memory_space<vmem>>, %arg5: memref<1x1x16x16xf32, #tpu.memory_space<vmem>>, %arg6: memref<1x16x16xf32, #tpu.memory_space<vmem>>, %arg7: memref<1x1x16x16xf32, #tpu.memory_space<vmem>>, %arg8: memref<1x1x16x16xf32, #tpu.memory_space<vmem>>, %arg9: memref<6x16x16xf32, #tpu.memory_space<vmem>>, %arg10: memref<6x16x16xf32, #tpu.memory_space<vmem>>, %arg11: memref<1x2x16x16xf32, #tpu.memory_space<vmem>>, %arg12: memref<16x16xf32, #tpu.memory_space<vmem>>, %arg13: memref<16x16xf32, #tpu.memory_space<vmem>>) attributes {dimension_semantics = [#tpu.dimension_semantics<parallel>, #tpu.dimension_semantics<arbitrary>], iteration_bounds = array<i64: 2, 4>, scalar_prefetch = 0 : i64, scratch_operands = 2 : i64, tpu.core_type = #tpu.core_type<tc>, window_params = [{transform_indices = @transform_0, window_bounds = array<i64: 1, 16, 16>}, {transform_indices = @transform_1, window_bounds = array<i64: 1, 16, 16>}, {transform_indices = @transform_2, window_bounds = array<i64: 1, 1, 16, 16>}, {transform_indices = @transform_3, window_bounds = array<i64: 1, 1, 16, 16>}, {transform_indices = @transform_4, window_bounds = array<i64: 1, 16, 16>}, {transform_indices = @transform_5, window_bounds = array<i64: 1, 1, 16, 16>}, {transform_indices = @transform_6, window_bounds = array<i64: 1, 1, 16, 16>}, {pipeline_mode = #tpu.pipeline_mode<synchronous>, transform_indices = @transform_7, window_bounds = array<i64: 6, 16, 16>}, {pipeline_mode = #tpu.pipeline_mode<synchronous>, transform_indices = @transform_8, window_bounds = array<i64: 6, 16, 16>}, {transform_indices = @transform_9, window_bounds = array<i64: 1, 2, 16, 16>}]} {
    %c0_i32 = arith.constant 0 : i32
    %0 = arith.cmpi eq, %arg1, %c0_i32 : i32
    %1 = arith.extui %0 : i1 to i32
    %c0_i32_0 = arith.constant 0 : i32
    %2 = arith.cmpi ne, %1, %c0_i32_0 : i32
    scf.if %2 {
      %cst_76 = arith.constant 0.000000e+00 : f32
      %97 = vector.broadcast %cst_76 : f32 to vector<16x16xf32>
      %c0_77 = arith.constant 0 : index
      %c0_78 = arith.constant 0 : index
      %98 = vector.load %arg12[%c0_77, %c0_78] : memref<16x16xf32, #tpu.memory_space<vmem>>, vector<16x16xf32>
      tpu.vector_store %arg12[%c0_77, %c0_78], %97 {strides = array<i32>} : memref<16x16xf32, #tpu.memory_space<vmem>>, vector<16x16xf32>,
      %cst_79 = arith.constant 0.000000e+00 : f32
      %99 = vector.broadcast %cst_79 : f32 to vector<16x16xf32>
      %c0_80 = arith.constant 0 : index
      %c0_81 = arith.constant 0 : index
      %100 = vector.load %arg13[%c0_80, %c0_81] : memref<16x16xf32, #tpu.memory_space<vmem>>, vector<16x16xf32>
      tpu.vector_store %arg13[%c0_80, %c0_81], %99 {strides = array<i32>} : memref<16x16xf32, #tpu.memory_space<vmem>>, vector<16x16xf32>,
    } else {
    }
    %c0 = arith.constant 0 : index
    %c0_1 = arith.constant 0 : index
    %c0_2 = arith.constant 0 : index
    %3 = vector.load %arg2[%c0, %c0_1, %c0_2] : memref<1x16x16xf32, #tpu.memory_space<vmem>>, vector<1x16x16xf32>
    %4 = vector.shape_cast %3 : vector<1x16x16xf32> to vector<16x16xf32>
    %c0_3 = arith.constant 0 : index
    %c0_4 = arith.constant 0 : index
    %c0_5 = arith.constant 0 : index
    %5 = vector.load %arg3[%c0_3, %c0_4, %c0_5] : memref<1x16x16xf32, #tpu.memory_space<vmem>>, vector<1x16x16xf32>
    %6 = vector.shape_cast %5 : vector<1x16x16xf32> to vector<16x16xf32>
    %c0_6 = arith.constant 0 : index
    %c0_7 = arith.constant 0 : index
    %c0_8 = arith.constant 0 : index
    %7 = vector.load %arg6[%c0_6, %c0_7, %c0_8] : memref<1x16x16xf32, #tpu.memory_space<vmem>>, vector<1x16x16xf32>
    %8 = vector.shape_cast %7 : vector<1x16x16xf32> to vector<16x16xf32>
    %9 = arith.mulf %8, %8 : vector<16x16xf32>
    %c0_9 = arith.constant 0 : index
    %c0_10 = arith.constant 0 : index
    %c0_11 = arith.constant 0 : index
    %10 = vector.load %arg9[%c0_9, %c0_10, %c0_11] : memref<6x16x16xf32, #tpu.memory_space<vmem>>, vector<1x16x16xf32>
    %11 = vector.shape_cast %10 : vector<1x16x16xf32> to vector<16x16xf32>
    %c1 = arith.constant 1 : index
    %c0_12 = arith.constant 0 : index
    %c0_13 = arith.constant 0 : index
    %12 = vector.load %arg9[%c1, %c0_12, %c0_13] : memref<6x16x16xf32, #tpu.memory_space<vmem>>, vector<1x16x16xf32>
    %13 = vector.shape_cast %12 : vector<1x16x16xf32> to vector<16x16xf32>
    %c2 = arith.constant 2 : index
    %c0_14 = arith.constant 0 : index
    %c0_15 = arith.constant 0 : index
    %14 = vector.load %arg9[%c2, %c0_14, %c0_15] : memref<6x16x16xf32, #tpu.memory_space<vmem>>, vector<1x16x16xf32>
    %15 = vector.shape_cast %14 : vector<1x16x16xf32> to vector<16x16xf32>
    %c3 = arith.constant 3 : index
    %c0_16 = arith.constant 0 : index
    %c0_17 = arith.constant 0 : index
    %16 = vector.load %arg9[%c3, %c0_16, %c0_17] : memref<6x16x16xf32, #tpu.memory_space<vmem>>, vector<1x16x16xf32>
    %17 = vector.shape_cast %16 : vector<1x16x16xf32> to vector<16x16xf32>
    %c4 = arith.constant 4 : index
    %c0_18 = arith.constant 0 : index
    %c0_19 = arith.constant 0 : index
    %18 = vector.load %arg9[%c4, %c0_18, %c0_19] : memref<6x16x16xf32, #tpu.memory_space<vmem>>, vector<1x16x16xf32>
    %19 = vector.shape_cast %18 : vector<1x16x16xf32> to vector<16x16xf32>
    %c5 = arith.constant 5 : index
    %c0_20 = arith.constant 0 : index
    %c0_21 = arith.constant 0 : index
    %20 = vector.load %arg9[%c5, %c0_20, %c0_21] : memref<6x16x16xf32, #tpu.memory_space<vmem>>, vector<1x16x16xf32>
    %21 = vector.shape_cast %20 : vector<1x16x16xf32> to vector<16x16xf32>
    %c0_22 = arith.constant 0 : index
    %c0_23 = arith.constant 0 : index
    %c0_24 = arith.constant 0 : index
    %22 = vector.load %arg10[%c0_22, %c0_23, %c0_24] : memref<6x16x16xf32, #tpu.memory_space<vmem>>, vector<1x16x16xf32>
    %23 = vector.shape_cast %22 : vector<1x16x16xf32> to vector<16x16xf32>
    %c1_25 = arith.constant 1 : index
    %c0_26 = arith.constant 0 : index
    %c0_27 = arith.constant 0 : index
    %24 = vector.load %arg10[%c1_25, %c0_26, %c0_27] : memref<6x16x16xf32, #tpu.memory_space<vmem>>, vector<1x16x16xf32>
    %25 = vector.shape_cast %24 : vector<1x16x16xf32> to vector<16x16xf32>
    %c2_28 = arith.constant 2 : index
    %c0_29 = arith.constant 0 : index
    %c0_30 = arith.constant 0 : index
    %26 = vector.load %arg10[%c2_28, %c0_29, %c0_30] : memref<6x16x16xf32, #tpu.memory_space<vmem>>, vector<1x16x16xf32>
    %27 = vector.shape_cast %26 : vector<1x16x16xf32> to vector<16x16xf32>
    %c3_31 = arith.constant 3 : index
    %c0_32 = arith.constant 0 : index
    %c0_33 = arith.constant 0 : index
    %28 = vector.load %arg10[%c3_31, %c0_32, %c0_33] : memref<6x16x16xf32, #tpu.memory_space<vmem>>, vector<1x16x16xf32>
    %29 = vector.shape_cast %28 : vector<1x16x16xf32> to vector<16x16xf32>
    %c4_34 = arith.constant 4 : index
    %c0_35 = arith.constant 0 : index
    %c0_36 = arith.constant 0 : index
    %30 = vector.load %arg10[%c4_34, %c0_35, %c0_36] : memref<6x16x16xf32, #tpu.memory_space<vmem>>, vector<1x16x16xf32>
    %31 = vector.shape_cast %30 : vector<1x16x16xf32> to vector<16x16xf32>
    %c5_37 = arith.constant 5 : index
    %c0_38 = arith.constant 0 : index
    %c0_39 = arith.constant 0 : index
    %32 = vector.load %arg10[%c5_37, %c0_38, %c0_39] : memref<6x16x16xf32, #tpu.memory_space<vmem>>, vector<1x16x16xf32>
    %33 = vector.shape_cast %32 : vector<1x16x16xf32> to vector<16x16xf32>
    %c0_40 = arith.constant 0 : index
    %c0_41 = arith.constant 0 : index
    %c0_42 = arith.constant 0 : index
    %c0_43 = arith.constant 0 : index
    %34 = vector.load %arg7[%c0_40, %c0_41, %c0_42, %c0_43] : memref<1x1x16x16xf32, #tpu.memory_space<vmem>>, vector<1x1x16x16xf32>
    %35 = vector.shape_cast %34 : vector<1x1x16x16xf32> to vector<16x16xf32>
    %c0_44 = arith.constant 0 : index
    %c0_45 = arith.constant 0 : index
    %c0_46 = arith.constant 0 : index
    %c0_47 = arith.constant 0 : index
    %36 = vector.load %arg8[%c0_44, %c0_45, %c0_46, %c0_47] : memref<1x1x16x16xf32, #tpu.memory_space<vmem>>, vector<1x1x16x16xf32>
    %37 = vector.shape_cast %36 : vector<1x1x16x16xf32> to vector<16x16xf32>
    %38 = arith.mulf %4, %35 : vector<16x16xf32>
    %39 = arith.mulf %6, %37 : vector<16x16xf32>
    %40 = arith.subf %38, %39 : vector<16x16xf32>
    %41 = arith.mulf %4, %37 : vector<16x16xf32>
    %42 = arith.mulf %6, %35 : vector<16x16xf32>
    %43 = arith.addf %41, %42 : vector<16x16xf32>
    %cst = arith.constant dense<0.000000e+00> : vector<16x16xf32>
    %44 = tpu.matmul %11, %40, %cst {dimension_numbers = #tpu.dot_dimension_numbers<[1], [0], [0], [1], [0, 0, 1, 1], [], []>} : vector<16x16xf32>, vector<16x16xf32>, vector<16x16xf32> -> vector<16x16xf32>
    %cst_48 = arith.constant dense<0.000000e+00> : vector<16x16xf32>
    %45 = tpu.matmul %13, %43, %cst_48 {dimension_numbers = #tpu.dot_dimension_numbers<[1], [0], [0], [1], [0, 0, 1, 1], [], []>} : vector<16x16xf32>, vector<16x16xf32>, vector<16x16xf32> -> vector<16x16xf32>
    %46 = arith.addf %40, %43 : vector<16x16xf32>
    %cst_49 = arith.constant dense<0.000000e+00> : vector<16x16xf32>
    %47 = tpu.matmul %15, %46, %cst_49 {dimension_numbers = #tpu.dot_dimension_numbers<[1], [0], [0], [1], [0, 0, 1, 1], [], []>} : vector<16x16xf32>, vector<16x16xf32>, vector<16x16xf32> -> vector<16x16xf32>
    %48 = arith.subf %44, %45 : vector<16x16xf32>
    %49 = arith.subf %47, %44 : vector<16x16xf32>
    %50 = arith.subf %49, %45 : vector<16x16xf32>
    %cst_50 = arith.constant dense<0.000000e+00> : vector<16x16xf32>
    %51 = tpu.matmul %48, %23, %cst_50 {dimension_numbers = #tpu.dot_dimension_numbers<[1], [0], [0], [1], [0, 0, 1, 1], [], []>} : vector<16x16xf32>, vector<16x16xf32>, vector<16x16xf32> -> vector<16x16xf32>
    %cst_51 = arith.constant dense<0.000000e+00> : vector<16x16xf32>
    %52 = tpu.matmul %50, %25, %cst_51 {dimension_numbers = #tpu.dot_dimension_numbers<[1], [0], [0], [1], [0, 0, 1, 1], [], []>} : vector<16x16xf32>, vector<16x16xf32>, vector<16x16xf32> -> vector<16x16xf32>
    %53 = arith.addf %48, %50 : vector<16x16xf32>
    %cst_52 = arith.constant dense<0.000000e+00> : vector<16x16xf32>
    %54 = tpu.matmul %53, %27, %cst_52 {dimension_numbers = #tpu.dot_dimension_numbers<[1], [0], [0], [1], [0, 0, 1, 1], [], []>} : vector<16x16xf32>, vector<16x16xf32>, vector<16x16xf32> -> vector<16x16xf32>
    %55 = arith.subf %51, %52 : vector<16x16xf32>
    %56 = arith.subf %54, %51 : vector<16x16xf32>
    %57 = arith.subf %56, %52 : vector<16x16xf32>
    %c0_53 = arith.constant 0 : index
    %c0_54 = arith.constant 0 : index
    %c0_55 = arith.constant 0 : index
    %c0_56 = arith.constant 0 : index
    %58 = vector.load %arg4[%c0_53, %c0_54, %c0_55, %c0_56] : memref<1x1x16x16xf32, #tpu.memory_space<vmem>>, vector<1x1x16x16xf32>
    %59 = vector.shape_cast %58 : vector<1x1x16x16xf32> to vector<16x16xf32>
    %60 = arith.mulf %55, %8 : vector<16x16xf32>
    %61 = arith.subf %59, %60 : vector<16x16xf32>
    %62 = arith.mulf %61, %9 : vector<16x16xf32>
    %c0_57 = arith.constant 0 : index
    %c0_58 = arith.constant 0 : index
    %c0_59 = arith.constant 0 : index
    %c0_60 = arith.constant 0 : index
    %63 = vector.load %arg5[%c0_57, %c0_58, %c0_59, %c0_60] : memref<1x1x16x16xf32, #tpu.memory_space<vmem>>, vector<1x1x16x16xf32>
    %64 = vector.shape_cast %63 : vector<1x1x16x16xf32> to vector<16x16xf32>
    %65 = arith.mulf %57, %8 : vector<16x16xf32>
    %66 = arith.subf %64, %65 : vector<16x16xf32>
    %67 = arith.mulf %66, %9 : vector<16x16xf32>
    %cst_61 = arith.constant dense<0.000000e+00> : vector<16x16xf32>
    %68 = tpu.matmul %17, %62, %cst_61 {dimension_numbers = #tpu.dot_dimension_numbers<[1], [0], [0], [1], [0, 0, 1, 1], [], []>} : vector<16x16xf32>, vector<16x16xf32>, vector<16x16xf32> -> vector<16x16xf32>
    %cst_62 = arith.constant dense<0.000000e+00> : vector<16x16xf32>
    %69 = tpu.matmul %19, %67, %cst_62 {dimension_numbers = #tpu.dot_dimension_numbers<[1], [0], [0], [1], [0, 0, 1, 1], [], []>} : vector<16x16xf32>, vector<16x16xf32>, vector<16x16xf32> -> vector<16x16xf32>
    %70 = arith.addf %62, %67 : vector<16x16xf32>
    %cst_63 = arith.constant dense<0.000000e+00> : vector<16x16xf32>
    %71 = tpu.matmul %21, %70, %cst_63 {dimension_numbers = #tpu.dot_dimension_numbers<[1], [0], [0], [1], [0, 0, 1, 1], [], []>} : vector<16x16xf32>, vector<16x16xf32>, vector<16x16xf32> -> vector<16x16xf32>
    %72 = arith.subf %68, %69 : vector<16x16xf32>
    %73 = arith.subf %71, %68 : vector<16x16xf32>
    %74 = arith.subf %73, %69 : vector<16x16xf32>
    %cst_64 = arith.constant dense<0.000000e+00> : vector<16x16xf32>
    %75 = tpu.matmul %72, %29, %cst_64 {dimension_numbers = #tpu.dot_dimension_numbers<[1], [0], [0], [1], [0, 0, 1, 1], [], []>} : vector<16x16xf32>, vector<16x16xf32>, vector<16x16xf32> -> vector<16x16xf32>
    %cst_65 = arith.constant dense<0.000000e+00> : vector<16x16xf32>
    %76 = tpu.matmul %74, %31, %cst_65 {dimension_numbers = #tpu.dot_dimension_numbers<[1], [0], [0], [1], [0, 0, 1, 1], [], []>} : vector<16x16xf32>, vector<16x16xf32>, vector<16x16xf32> -> vector<16x16xf32>
    %77 = arith.addf %72, %74 : vector<16x16xf32>
    %cst_66 = arith.constant dense<0.000000e+00> : vector<16x16xf32>
    %78 = tpu.matmul %77, %33, %cst_66 {dimension_numbers = #tpu.dot_dimension_numbers<[1], [0], [0], [1], [0, 0, 1, 1], [], []>} : vector<16x16xf32>, vector<16x16xf32>, vector<16x16xf32> -> vector<16x16xf32>
    %79 = arith.subf %75, %76 : vector<16x16xf32>
    %80 = arith.subf %78, %75 : vector<16x16xf32>
    %81 = arith.subf %80, %76 : vector<16x16xf32>
    %c0_67 = arith.constant 0 : index
    %c0_68 = arith.constant 0 : index
    %82 = vector.load %arg12[%c0_67, %c0_68] : memref<16x16xf32, #tpu.memory_space<vmem>>, vector<16x16xf32>
    %83 = arith.mulf %35, %79 : vector<16x16xf32>
    %84 = arith.mulf %37, %81 : vector<16x16xf32>
    %85 = arith.addf %83, %84 : vector<16x16xf32>
    %86 = arith.addf %82, %85 : vector<16x16xf32>
    %c0_69 = arith.constant 0 : index
    %c0_70 = arith.constant 0 : index
    %87 = vector.load %arg12[%c0_69, %c0_70] : memref<16x16xf32, #tpu.memory_space<vmem>>, vector<16x16xf32>
    tpu.vector_store %arg12[%c0_69, %c0_70], %86 {strides = array<i32>} : memref<16x16xf32, #tpu.memory_space<vmem>>, vector<16x16xf32>,
    %c0_71 = arith.constant 0 : index
    %c0_72 = arith.constant 0 : index
    %88 = vector.load %arg13[%c0_71, %c0_72] : memref<16x16xf32, #tpu.memory_space<vmem>>, vector<16x16xf32>
    %89 = arith.mulf %35, %81 : vector<16x16xf32>
    %90 = arith.mulf %37, %79 : vector<16x16xf32>
    %91 = arith.subf %89, %90 : vector<16x16xf32>
    %92 = arith.addf %88, %91 : vector<16x16xf32>
    %c0_73 = arith.constant 0 : index
    %c0_74 = arith.constant 0 : index
    %93 = vector.load %arg13[%c0_73, %c0_74] : memref<16x16xf32, #tpu.memory_space<vmem>>, vector<16x16xf32>
    tpu.vector_store %arg13[%c0_73, %c0_74], %92 {strides = array<i32>} : memref<16x16xf32, #tpu.memory_space<vmem>>, vector<16x16xf32>,
    %c3_i32 = arith.constant 3 : i32
    %94 = arith.cmpi eq, %arg1, %c3_i32 : i32
    %95 = arith.extui %94 : i1 to i32
    %c0_i32_75 = arith.constant 0 : i32
    %96 = arith.cmpi ne, %95, %c0_i32_75 : i32
    scf.if %96 {
      %c0_76 = arith.constant 0 : index
      %c0_77 = arith.constant 0 : index
      %97 = vector.load %arg12[%c0_76, %c0_77] : memref<16x16xf32, #tpu.memory_space<vmem>>, vector<16x16xf32>
      %98 = arith.addf %4, %97 : vector<16x16xf32>
      %c0_78 = arith.constant 0 : index
      %c0_79 = arith.constant 0 : index
      %c0_80 = arith.constant 0 : index
      %c0_81 = arith.constant 0 : index
      %99 = vector.load %arg11[%c0_78, %c0_79, %c0_80, %c0_81] : memref<1x2x16x16xf32, #tpu.memory_space<vmem>>, vector<1x1x16x16xf32>
      %100 = vector.shape_cast %99 : vector<1x1x16x16xf32> to vector<16x16xf32>
      %101 = vector.shape_cast %98 : vector<16x16xf32> to vector<1x1x16x16xf32>
      tpu.vector_store %arg11[%c0_78, %c0_79, %c0_80, %c0_81], %101 {strides = array<i32>} : memref<1x2x16x16xf32, #tpu.memory_space<vmem>>, vector<1x1x16x16xf32>,
      %c0_82 = arith.constant 0 : index
      %c0_83 = arith.constant 0 : index
      %102 = vector.load %arg13[%c0_82, %c0_83] : memref<16x16xf32, #tpu.memory_space<vmem>>, vector<16x16xf32>
      %103 = arith.addf %6, %102 : vector<16x16xf32>
      %c0_84 = arith.constant 0 : index
      %c1_85 = arith.constant 1 : index
      %c0_86 = arith.constant 0 : index
      %c0_87 = arith.constant 0 : index
      %104 = vector.load %arg11[%c0_84, %c1_85, %c0_86, %c0_87] : memref<1x2x16x16xf32, #tpu.memory_space<vmem>>, vector<1x1x16x16xf32>
      %105 = vector.shape_cast %104 : vector<1x1x16x16xf32> to vector<16x16xf32>
      %106 = vector.shape_cast %103 : vector<16x16xf32> to vector<1x1x16x16xf32>
      tpu.vector_store %arg11[%c0_84, %c1_85, %c0_86, %c0_87], %106 {strides = array<i32>} : memref<1x2x16x16xf32, #tpu.memory_space<vmem>>, vector<1x1x16x16xf32>,
    } else {
    }
    return
  }
  func.func @transform_0(%arg0: i32, %arg1: i32) -> (i32, i32, i32) {
    %c0_i32 = arith.constant 0 : i32
    %c0_i32_0 = arith.constant 0 : i32
    %c0_i32_1 = arith.constant 0 : i32
    return %arg0, %c0_i32, %c0_i32_0 : i32, i32, i32
  }
  func.func @transform_1(%arg0: i32, %arg1: i32) -> (i32, i32, i32) {
    %c0_i32 = arith.constant 0 : i32
    %c0_i32_0 = arith.constant 0 : i32
    %c0_i32_1 = arith.constant 0 : i32
    return %arg0, %c0_i32, %c0_i32_0 : i32, i32, i32
  }
  func.func @transform_2(%arg0: i32, %arg1: i32) -> (i32, i32, i32, i32) {
    %c0_i32 = arith.constant 0 : i32
    %c0_i32_0 = arith.constant 0 : i32
    %c0_i32_1 = arith.constant 0 : i32
    return %arg0, %arg1, %c0_i32, %c0_i32_0 : i32, i32, i32, i32
  }
  func.func @transform_3(%arg0: i32, %arg1: i32) -> (i32, i32, i32, i32) {
    %c0_i32 = arith.constant 0 : i32
    %c0_i32_0 = arith.constant 0 : i32
    %c0_i32_1 = arith.constant 0 : i32
    return %arg0, %arg1, %c0_i32, %c0_i32_0 : i32, i32, i32, i32
  }
  func.func @transform_4(%arg0: i32, %arg1: i32) -> (i32, i32, i32) {
    %c0_i32 = arith.constant 0 : i32
    %c0_i32_0 = arith.constant 0 : i32
    %c0_i32_1 = arith.constant 0 : i32
    return %arg0, %c0_i32, %c0_i32_0 : i32, i32, i32
  }
  func.func @transform_5(%arg0: i32, %arg1: i32) -> (i32, i32, i32, i32) {
    %c0_i32 = arith.constant 0 : i32
    %c0_i32_0 = arith.constant 0 : i32
    %c0_i32_1 = arith.constant 0 : i32
    return %arg0, %arg1, %c0_i32, %c0_i32_0 : i32, i32, i32, i32
  }
  func.func @transform_6(%arg0: i32, %arg1: i32) -> (i32, i32, i32, i32) {
    %c0_i32 = arith.constant 0 : i32
    %c0_i32_0 = arith.constant 0 : i32
    %c0_i32_1 = arith.constant 0 : i32
    return %arg0, %arg1, %c0_i32, %c0_i32_0 : i32, i32, i32, i32
  }
  func.func @transform_7(%arg0: i32, %arg1: i32) -> (i32, i32, i32) {
    %c0_i32 = arith.constant 0 : i32
    %c0_i32_0 = arith.constant 0 : i32
    %c0_i32_1 = arith.constant 0 : i32
    %c0_i32_2 = arith.constant 0 : i32
    return %c0_i32, %c0_i32_0, %c0_i32_1 : i32, i32, i32
  }
  func.func @transform_8(%arg0: i32, %arg1: i32) -> (i32, i32, i32) {
    %c0_i32 = arith.constant 0 : i32
    %c0_i32_0 = arith.constant 0 : i32
    %c0_i32_1 = arith.constant 0 : i32
    %c0_i32_2 = arith.constant 0 : i32
    return %c0_i32, %c0_i32_0, %c0_i32_1 : i32, i32, i32
  }
  func.func @transform_9(%arg0: i32, %arg1: i32) -> (i32, i32, i32, i32) {
    %c0_i32 = arith.constant 0 : i32
    %c0_i32_0 = arith.constant 0 : i32
    %c0_i32_1 = arith.constant 0 : i32
    %c0_i32_2 = arith.constant 0 : i32
    return %arg0, %c0_i32, %c0_i32_0, %c0_i32_1 : i32, i32, i32, i32
  }
}

</mosaic_0001>

<llo_original>
// kernel: tpu_custom_call.1
$region0: #{tpu_custom_call.1}
  #allocation0 [shape = 'u32[]', space=smem, size = 0x4, offset = 0x4, fixed_abs, tag = 'smem constant byte address 0x4 - core index']
  #allocation1 [shape = 'u32[144,128]{1,0:T(1,128)}', space=vmem, size = 0x12000, scoped, tag = 'internal scratch']
  #allocation2 [shape = 'f32[16,16]{1,0:T(8,128)}', space=vmem, size = 0x2000, scoped, tag = 'scratch operand']
  #allocation3 [shape = 'f32[16,16]{1,0:T(8,128)}', space=vmem, size = 0x2000, scoped, tag = 'scratch operand']
  %s0 = inlined_call_operand.hbm [shape: f32[2,16,16], index: 0, kind: input, shape index: {}]
  %s1 = inlined_call_operand.hbm [shape: f32[2,16,16], index: 1, kind: input, shape index: {}]
  %s2 = inlined_call_operand.hbm [shape: f32[2,4,16,16], index: 2, kind: input, shape index: {}]
  %s3 = inlined_call_operand.hbm [shape: f32[2,4,16,16], index: 3, kind: input, shape index: {}]
  %s4 = inlined_call_operand.hbm [shape: f32[2,16,16], index: 4, kind: input, shape index: {}]
  %s5 = inlined_call_operand.hbm [shape: f32[2,4,16,16], index: 5, kind: input, shape index: {}]
  %s6 = inlined_call_operand.hbm [shape: f32[2,4,16,16], index: 6, kind: input, shape index: {}]
  %s7 = inlined_call_operand.hbm [shape: f32[6,16,16], index: 7, kind: input, shape index: {}]
  %s8 = inlined_call_operand.hbm [shape: f32[6,16,16], index: 8, kind: input, shape index: {}]
  %s9 = inlined_call_operand.hbm [shape: f32[2,2,16,16], index: 9, kind: output, shape index: {}]
  %s10 = sld [smem:[#allocation0]]
  $region113: #{tpu_custom_call.1} parent=0
    _
  %s12 = ssub.s32 1, %s10
  %s13 = scalar_select 0, %s12, %s10
  $region1: #{tpu_custom_call.1} parent=0
    #allocation4 [shape = 'u8[16384]{0}', space=vmem, size = 0x4000, scoped, tag = 'input window, operand 0']
    #allocation5 [shape = 's32[2]{0}', space=sflag, size = 0x8, scoped, tag = 'scoped memory for tpu_custom_call.1']
    #allocation6 [shape = 's32[2]{0}', space=sflag, size = 0x8, scoped, tag = 'scoped memory for tpu_custom_call.1']
    #allocation7 [shape = 'u8[16384]{0}', space=vmem, size = 0x4000, scoped, tag = 'input window, operand 1']
    #allocation8 [shape = 's32[2]{0}', space=sflag, size = 0x8, scoped, tag = 'scoped memory for tpu_custom_call.1']
    #allocation9 [shape = 'u8[16384]{0}', space=vmem, size = 0x4000, scoped, tag = 'input window, operand 2']
    #allocation10 [shape = 'u8[16384]{0}', space=vmem, size = 0x4000, scoped, tag = 'input window, operand 3']
    #allocation11 [shape = 's32[2]{0}', space=sflag, size = 0x8, scoped, tag = 'scoped memory for tpu_custom_call.1']
    #allocation12 [shape = 'u8[16384]{0}', space=vmem, size = 0x4000, scoped, tag = 'input window, operand 4']
    #allocation13 [shape = 'u8[16384]{0}', space=vmem, size = 0x4000, scoped, tag = 'input window, operand 5']
    #allocation14 [shape = 's32[2]{0}', space=sflag, size = 0x8, scoped, tag = 'scoped memory for tpu_custom_call.1']
    #allocation15 [shape = 'u8[16384]{0}', space=vmem, size = 0x4000, scoped, tag = 'input window, operand 6']
    #allocation16 [shape = 'u8[49152]{0}', space=vmem, size = 0xc000, scoped, tag = 'input window, operand 7, single buffered']
    #allocation17 [shape = 's32[1]{0}', space=sflag, size = 0x4, scoped, tag = 'scoped memory for tpu_custom_call.1']
    #allocation18 [shape = 'u8[49152]{0}', space=vmem, size = 0xc000, scoped, tag = 'input window, operand 8, single buffered']
    #allocation19 [shape = 'u8[32768]{0}', space=vmem, size = 0x8000, scoped, tag = 'output window, operand 0']
    %14 = vsyncpa [#allocation5], 0
    %s15 = scalar_lea.sflag [#allocation5], 1
    %16 = vsyncpa %s15, 0
    %17 = vsyncpa [#allocation8], 0
    %s18 = scalar_lea.sflag [#allocation8], 1
    %19 = vsyncpa %s18, 0
    %20 = vsyncpa [#allocation11], 0
    %s21 = scalar_lea.sflag [#allocation11], 1
    %22 = vsyncpa %s21, 0
    %23 = vsyncpa [#allocation14], 0
    %s24 = scalar_lea.sflag [#allocation14], 1
    %25 = vsyncpa %s24, 0
    %26 = vsyncpa [#allocation17], 0
    %27 = vsyncpa [#allocation6], 0
    %s28 = scalar_lea.sflag [#allocation6], 1
    %29 = vsyncpa %s28, 0
    loop: start=0, step=1, limit=10
    $region2: #{tpu_custom_call.1} parent=1 // loop_pre_header
      _
    $region3: #{tpu_custom_call.1} parent=1 // loop_header
      %s31 = sphi 0, %s35
      %p32 = scmp.ge.s32.totalorder %s31, 10
      %s38 = sphi 0, %s50
      %s39 = sphi 0, %s46
      %s40 = sphi 0, %s38
      %s41 = sphi 0, %s39
      %s42 = sphi 0, %s40
      %s43 = sphi 0, %s41
      %s53 = sphi 0, %s55
      %s56 = sphi 0, %s53
      %s57 = sphi 0, %s56
      %s73 = sphi 0, %s57
      %s79 = sphi 0, %s81
      %s82 = sphi 0, %s79
      %s83 = sphi 0, %s82
      %s99 = sphi 0, %s83
      %s107 = sphi 0, %s109
      %s110 = sphi 0, %s107
      %s111 = sphi 0, %s110
      %s127 = sphi 0, %s111
      %s135 = sphi 0, %s137
      %s138 = sphi 0, %s135
      %s139 = sphi 0, %s138
      %s155 = sphi 0, %s139
      %s161 = sphi 0, %s163
      %s164 = sphi 0, %s161
      %s165 = sphi 0, %s164
      %s181 = sphi 0, %s165
      %s189 = sphi 0, %s191
      %s192 = sphi 0, %s189
      %s193 = sphi 0, %s192
      %s209 = sphi 0, %s193
      %s217 = sphi 0, %s219
      %s220 = sphi 0, %s217
      %s221 = sphi 0, %s220
      %s237 = sphi 0, %s221
      %s241 = sphi 0, %s241
      %s243 = sphi 0, %s241
      %s244 = sphi 0, %s243
      %s258 = sphi 0, %s244
      %s262 = sphi 0, %s262
      %s264 = sphi 0, %s262
      %s265 = sphi 0, %s264
      %s279 = sphi 0, %s265
      %s285 = sphi 0, %s287
      %s288 = sphi 0, %s285
      %s289 = sphi 0, %s288
      %s305 = sphi 0, %s289
    $region4: #{tpu_custom_call.1} parent=1 // loop_header_branch
      %34 = sbr.rel (%p32) target = $region8
    $region5: #{tpu_custom_call.1} parent=1 // loop_body
      %s36 = ssub.s32 %s31, 1
      %s37 = ssub.s32 %s31, 2
      %s44 = sadd.s32 1, %s39
      %p45 = scmp.ge.s32.totalorder %s44, 4
      %s46 = scalar_select %p45, 0, %s44
      %s47 = sadd.s32 1, %s38
      %s48 = scalar_select %p45, %s47, %s38
      %p49 = scmp.ge.s32.totalorder %s48, 2
      %s50 = scalar_select %p49, 0, %s48
      %s51 = ssub.s32 %s38, %s50
      %p52 = scmp.eq.s32.totalorder %s51, 0
      %s54 = sadd.s32 %s53, 1
      %s55 = scalar_select %p52, %s53, %s54
      %p58 = pneg %p52
      %p59 = scmp.eq.s32.totalorder %s31, 7
      %p60 = por %p58, %p59
      %p61 = scmp.ne.s32.totalorder %s53, %s56
      %p62 = scmp.eq.s32.totalorder %s31, 0
      %p63 = por %p61, %p62
      %p64 = scmp.ne.s32.totalorder %s53, %s56
      %p65 = scmp.eq.s32.totalorder %s36, 7
      %p66 = por %p64, %p65
      %p67 = scmp.ne.s32.totalorder %s56, %s57
      %p68 = scmp.eq.s32.totalorder %s36, 0
      %p69 = por %p67, %p68
      %p70 = scmp.ne.s32.totalorder %s56, %s57
      %p71 = scmp.eq.s32.totalorder %s37, 7
      %p72 = por %p70, %p71
      %p74 = scmp.ne.s32.totalorder %s57, %s73
      %p75 = scmp.eq.s32.totalorder %s37, 0
      %p76 = por %p74, %p75
      %s77 = ssub.s32 %s38, %s50
      %p78 = scmp.eq.s32.totalorder %s77, 0
      %s80 = sadd.s32 %s79, 1
      %s81 = scalar_select %p78, %s79, %s80
      %p84 = pneg %p78
      %p85 = scmp.eq.s32.totalorder %s31, 7
      %p86 = por %p84, %p85
      %p87 = scmp.ne.s32.totalorder %s79, %s82
      %p88 = scmp.eq.s32.totalorder %s31, 0
      %p89 = por %p87, %p88
      %p90 = scmp.ne.s32.totalorder %s79, %s82
      %p91 = scmp.eq.s32.totalorder %s36, 7
      %p92 = por %p90, %p91
      %p93 = scmp.ne.s32.totalorder %s82, %s83
      %p94 = scmp.eq.s32.totalorder %s36, 0
      %p95 = por %p93, %p94
      %p96 = scmp.ne.s32.totalorder %s82, %s83
      %p97 = scmp.eq.s32.totalorder %s37, 7
      %p98 = por %p96, %p97
      %p100 = scmp.ne.s32.totalorder %s83, %s99
      %p101 = scmp.eq.s32.totalorder %s37, 0
      %p102 = por %p100, %p101
      %s103 = ssub.s32 %s38, %s50
      %s104 = ssub.s32 %s39, %s46
      %s105 = sor.u32 %s103, %s104
      %p106 = scmp.eq.s32.totalorder %s105, 0
      %s108 = sadd.s32 %s107, 1
      %s109 = scalar_select %p106, %s107, %s108
      %p112 = pneg %p106
      %p113 = scmp.eq.s32.totalorder %s31, 7
      %p114 = por %p112, %p113
      %p115 = scmp.ne.s32.totalorder %s107, %s110
      %p116 = scmp.eq.s32.totalorder %s31, 0
      %p117 = por %p115, %p116
      %p118 = scmp.ne.s32.totalorder %s107, %s110
      %p119 = scmp.eq.s32.totalorder %s36, 7
      %p120 = por %p118, %p119
      %p121 = scmp.ne.s32.totalorder %s110, %s111
      %p122 = scmp.eq.s32.totalorder %s36, 0
      %p123 = por %p121, %p122
      %p124 = scmp.ne.s32.totalorder %s110, %s111
      %p125 = scmp.eq.s32.totalorder %s37, 7
      %p126 = por %p124, %p125
      %p128 = scmp.ne.s32.totalorder %s111, %s127
      %p129 = scmp.eq.s32.totalorder %s37, 0
      %p130 = por %p128, %p129
      %s131 = ssub.s32 %s38, %s50
      %s132 = ssub.s32 %s39, %s46
      %s133 = sor.u32 %s131, %s132
      %p134 = scmp.eq.s32.totalorder %s133, 0
      %s136 = sadd.s32 %s135, 1
      %s137 = scalar_select %p134, %s135, %s136
      %p140 = pneg %p134
      %p141 = scmp.eq.s32.totalorder %s31, 7
      %p142 = por %p140, %p141
      %p143 = scmp.ne.s32.totalorder %s135, %s138
      %p144 = scmp.eq.s32.totalorder %s31, 0
      %p145 = por %p143, %p144
      %p146 = scmp.ne.s32.totalorder %s135, %s138
      %p147 = scmp.eq.s32.totalorder %s36, 7
      %p148 = por %p146, %p147
      %p149 = scmp.ne.s32.totalorder %s138, %s139
      %p150 = scmp.eq.s32.totalorder %s36, 0
      %p151 = por %p149, %p150
      %p152 = scmp.ne.s32.totalorder %s138, %s139
      %p153 = scmp.eq.s32.totalorder %s37, 7
      %p154 = por %p152, %p153
      %p156 = scmp.ne.s32.totalorder %s139, %s155
      %p157 = scmp.eq.s32.totalorder %s37, 0
      %p158 = por %p156, %p157
      %s159 = ssub.s32 %s38, %s50
      %p160 = scmp.eq.s32.totalorder %s159, 0
      %s162 = sadd.s32 %s161, 1
      %s163 = scalar_select %p160, %s161, %s162
      %p166 = pneg %p160
      %p167 = scmp.eq.s32.totalorder %s31, 7
      %p168 = por %p166, %p167
      %p169 = scmp.ne.s32.totalorder %s161, %s164
      %p170 = scmp.eq.s32.totalorder %s31, 0
      %p171 = por %p169, %p170
      %p172 = scmp.ne.s32.totalorder %s161, %s164
      %p173 = scmp.eq.s32.totalorder %s36, 7
      %p174 = por %p172, %p173
      %p175 = scmp.ne.s32.totalorder %s164, %s165
      %p176 = scmp.eq.s32.totalorder %s36, 0
      %p177 = por %p175, %p176
      %p178 = scmp.ne.s32.totalorder %s164, %s165
      %p179 = scmp.eq.s32.totalorder %s37, 7
      %p180 = por %p178, %p179
      %p182 = scmp.ne.s32.totalorder %s165, %s181
      %p183 = scmp.eq.s32.totalorder %s37, 0
      %p184 = por %p182, %p183
      %s185 = ssub.s32 %s38, %s50
      %s186 = ssub.s32 %s39, %s46
      %s187 = sor.u32 %s185, %s186
      %p188 = scmp.eq.s32.totalorder %s187, 0
      %s190 = sadd.s32 %s189, 1
      %s191 = scalar_select %p188, %s189, %s190
      %p194 = pneg %p188
      %p195 = scmp.eq.s32.totalorder %s31, 7
      %p196 = por %p194, %p195
      %p197 = scmp.ne.s32.totalorder %s189, %s192
      %p198 = scmp.eq.s32.totalorder %s31, 0
      %p199 = por %p197, %p198
      %p200 = scmp.ne.s32.totalorder %s189, %s192
      %p201 = scmp.eq.s32.totalorder %s36, 7
      %p202 = por %p200, %p201
      %p203 = scmp.ne.s32.totalorder %s192, %s193
      %p204 = scmp.eq.s32.totalorder %s36, 0
      %p205 = por %p203, %p204
      %p206 = scmp.ne.s32.totalorder %s192, %s193
      %p207 = scmp.eq.s32.totalorder %s37, 7
      %p208 = por %p206, %p207
      %p210 = scmp.ne.s32.totalorder %s193, %s209
      %p211 = scmp.eq.s32.totalorder %s37, 0
      %p212 = por %p210, %p211
      %s213 = ssub.s32 %s38, %s50
      %s214 = ssub.s32 %s39, %s46
      %s215 = sor.u32 %s213, %s214
      %p216 = scmp.eq.s32.totalorder %s215, 0
      %s218 = sadd.s32 %s217, 1
      %s219 = scalar_select %p216, %s217, %s218
      %p222 = pneg %p216
      %p223 = scmp.eq.s32.totalorder %s31, 7
      %p224 = por %p222, %p223
      %p225 = scmp.ne.s32.totalorder %s217, %s220
      %p226 = scmp.eq.s32.totalorder %s31, 0
      %p227 = por %p225, %p226
      %p228 = scmp.ne.s32.totalorder %s217, %s220
      %p229 = scmp.eq.s32.totalorder %s36, 7
      %p230 = por %p228, %p229
      %p231 = scmp.ne.s32.totalorder %s220, %s221
      %p232 = scmp.eq.s32.totalorder %s36, 0
      %p233 = por %p231, %p232
      %p234 = scmp.ne.s32.totalorder %s220, %s221
      %p235 = scmp.eq.s32.totalorder %s37, 7
      %p236 = por %p234, %p235
      %p238 = scmp.ne.s32.totalorder %s221, %s237
      %p239 = scmp.eq.s32.totalorder %s37, 0
      %p240 = por %p238, %p239
      %s242 = sadd.s32 %s241, 1
      %p245 = scmp.eq.s32.totalorder %s31, 7
      %p246 = scmp.ne.s32.totalorder %s241, %s243
      %p247 = scmp.eq.s32.totalorder %s31, 0
      %p248 = por %p246, %p247
      %p249 = scmp.ne.s32.totalorder %s241, %s243
      %p250 = scmp.eq.s32.totalorder %s36, 7
      %p251 = por %p249, %p250
      %p252 = scmp.ne.s32.totalorder %s243, %s244
      %p253 = scmp.eq.s32.totalorder %s36, 0
      %p254 = por %p252, %p253
      %p255 = scmp.ne.s32.totalorder %s243, %s244
      %p256 = scmp.eq.s32.totalorder %s37, 7
      %p257 = por %p255, %p256
      %p259 = scmp.ne.s32.totalorder %s244, %s258
      %p260 = scmp.eq.s32.totalorder %s37, 0
      %p261 = por %p259, %p260
      %s263 = sadd.s32 %s262, 1
      %p266 = scmp.eq.s32.totalorder %s31, 7
      %p267 = scmp.ne.s32.totalorder %s262, %s264
      %p268 = scmp.eq.s32.totalorder %s31, 0
      %p269 = por %p267, %p268
      %p270 = scmp.ne.s32.totalorder %s262, %s264
      %p271 = scmp.eq.s32.totalorder %s36, 7
      %p272 = por %p270, %p271
      %p273 = scmp.ne.s32.totalorder %s264, %s265
      %p274 = scmp.eq.s32.totalorder %s36, 0
      %p275 = por %p273, %p274
      %p276 = scmp.ne.s32.totalorder %s264, %s265
      %p277 = scmp.eq.s32.totalorder %s37, 7
      %p278 = por %p276, %p277
      %p280 = scmp.ne.s32.totalorder %s265, %s279
      %p281 = scmp.eq.s32.totalorder %s37, 0
      %p282 = por %p280, %p281
      %s283 = ssub.s32 %s38, %s50
      %p284 = scmp.eq.s32.totalorder %s283, 0
      %s286 = sadd.s32 %s285, 1
      %s287 = scalar_select %p284, %s285, %s286
      %p290 = pneg %p284
      %p291 = scmp.eq.s32.totalorder %s31, 7
      %p292 = por %p290, %p291
      %p293 = scmp.ne.s32.totalorder %s285, %s288
      %p294 = scmp.eq.s32.totalorder %s31, 0
      %p295 = por %p293, %p294
      %p296 = scmp.ne.s32.totalorder %s285, %s288
      %p297 = scmp.eq.s32.totalorder %s36, 7
      %p298 = por %p296, %p297
      %p299 = scmp.ne.s32.totalorder %s288, %s289
      %p300 = scmp.eq.s32.totalorder %s36, 0
      %p301 = por %p299, %p300
      %p302 = scmp.ne.s32.totalorder %s288, %s289
      %p303 = scmp.eq.s32.totalorder %s37, 7
      %p304 = por %p302, %p303
      %p306 = scmp.ne.s32.totalorder %s289, %s305
      %p307 = scmp.eq.s32.totalorder %s37, 0
      %p308 = por %p306, %p307
      %p309 = scmp.le.s32.totalorder 1, %s31
      %p310 = scmp.lt.s32.totalorder %s31, 9
      %p311 = pnand %p309, %p310
      %p312 = pneg %p311
      // Predicated region
      $region9: #{tpu_custom_call.1} parent=5 // pred_check
        _
      $region10: #{tpu_custom_call.1} parent=5 // pred_check_branch
        %314 = sbr.rel (%p311) target = $region12
      $region11: #{tpu_custom_call.1} parent=5 // pred_region
        %s315 = ssub.s32 %s31, 1
        // Predicated region
        $region13: #{tpu_custom_call.1} parent=11 // pred_check
          %p316 = pneg %p254
        $region14: #{tpu_custom_call.1} parent=11 // pred_check_branch
          %318 = sbr.rel (%p316) target = $region16
        $region15: #{tpu_custom_call.1} parent=11 // pred_region
          %s320 = ssub.s32 1536, 1536
          %321 = vsyncadd [#allocation17], %s320
          %s322 = sshll.u32 [#allocation16], 4
          %s323 = int_to_ptr.vmem [resolvable:$true] %s322
          %328 = dma.hbm_to_vmem [thread:$0]  %s7, 1536, %s323, [#allocation17], 128, 128, 8
        $region16: #{tpu_custom_call.1} parent=11 // pred_fallthru
          _
        // Predicated region
        $region17: #{tpu_custom_call.1} parent=11 // pred_check
          %p329 = pneg %p275
        $region18: #{tpu_custom_call.1} parent=11 // pred_check_branch
          %331 = sbr.rel (%p329) target = $region20
        $region19: #{tpu_custom_call.1} parent=11 // pred_region
          %s333 = ssub.s32 1536, 1536
          %334 = vsyncadd [#allocation17], %s333
          %s335 = sshll.u32 [#allocation18], 4
          %s336 = int_to_ptr.vmem [resolvable:$true] %s335
          %341 = dma.hbm_to_vmem [thread:$0]  %s8, 1536, %s336, [#allocation17], 128, 128, 8
        $region20: #{tpu_custom_call.1} parent=11 // pred_fallthru
          _
      $region12: #{tpu_custom_call.1} parent=5 // pred_fallthru
        _
      %p342 = scmp.lt.s32.totalorder %s31, 8
      // Predicated region
      $region21: #{tpu_custom_call.1} parent=5 // pred_check
        %p343 = pneg %p342
      $region22: #{tpu_custom_call.1} parent=5 // pred_check_branch
        %345 = sbr.rel (%p343) target = $region24
      $region23: #{tpu_custom_call.1} parent=5 // pred_region
        // Predicated region
        $region25: #{tpu_custom_call.1} parent=23 // pred_check
          %p346 = pneg %p63
        $region26: #{tpu_custom_call.1} parent=23 // pred_check_branch
          %348 = sbr.rel (%p346) target = $region28
        $region27: #{tpu_custom_call.1} parent=23 // pred_region
          %s349 = sand.u32 %s53, 1
          %s350 = scalar_lea.sflag [#allocation5], %s349
          %s351 = sand.u32 %s53, 1
          %s352 = smul.addr %s351, 16
          %s353 = scalar_lea.vmem [#allocation4], %s352
          %s355 = ssub.s32 256, 256
          %356 = vsyncadd %s350, %s355
          %s357 = smul.addr %s38, 2
          %s358 = smul.addr %s357, 128
          %s359 = scalar_lea.hbm %s0, %s358
          %s360 = sshll.u32 %s353, 4
          %s361 = int_to_ptr.vmem [resolvable:$true] %s360
          %366 = dma.hbm_to_vmem [thread:$0]  %s359, 256, %s361, %s350, 128, 128, 8
        $region28: #{tpu_custom_call.1} parent=23 // pred_fallthru
          _
        // Predicated region
        $region29: #{tpu_custom_call.1} parent=23 // pred_check
          %p367 = pneg %p89
        $region30: #{tpu_custom_call.1} parent=23 // pred_check_branch
          %369 = sbr.rel (%p367) target = $region32
        $region31: #{tpu_custom_call.1} parent=23 // pred_region
          %s370 = sand.u32 %s31, 1
          %s371 = scalar_lea.sflag [#allocation8], %s370
          %s372 = sand.u32 %s79, 1
          %s373 = smul.addr %s372, 16
          %s374 = scalar_lea.vmem [#allocation7], %s373
          %s376 = ssub.s32 256, 256
          %377 = vsyncadd %s371, %s376
          %s378 = smul.addr %s38, 2
          %s379 = smul.addr %s378, 128
          %s380 = scalar_lea.hbm %s1, %s379
          %s381 = sshll.u32 %s374, 4
          %s382 = int_to_ptr.vmem [resolvable:$true] %s381
          %387 = dma.hbm_to_vmem [thread:$0]  %s380, 256, %s382, %s371, 128, 128, 8
        $region32: #{tpu_custom_call.1} parent=23 // pred_fallthru
          _
        // Predicated region
        $region33: #{tpu_custom_call.1} parent=23 // pred_check
          %p388 = pneg %p117
        $region34: #{tpu_custom_call.1} parent=23 // pred_check_branch
          %390 = sbr.rel (%p388) target = $region36
        $region35: #{tpu_custom_call.1} parent=23 // pred_region
          %s391 = sand.u32 %s31, 1
          %s392 = scalar_lea.sflag [#allocation8], %s391
          %s393 = sand.u32 %s107, 1
          %s394 = smul.addr %s393, 16
          %s395 = scalar_lea.vmem [#allocation9], %s394
          %s397 = ssub.s32 256, 256
          %398 = vsyncadd %s392, %s397
          %s399 = smul.addr %s39, 2
          %s400 = smul.addr %s38, 8
          %s401 = sadd.s32 %s399, %s400
          %s402 = smul.addr %s401, 128
          %s403 = scalar_lea.hbm %s2, %s402
          %s404 = sshll.u32 %s395, 4
          %s405 = int_to_ptr.vmem [resolvable:$true] %s404
          %410 = dma.hbm_to_vmem [thread:$0]  %s403, 256, %s405, %s392, 128, 128, 8
        $region36: #{tpu_custom_call.1} parent=23 // pred_fallthru
          _
        // Predicated region
        $region37: #{tpu_custom_call.1} parent=23 // pred_check
          %p411 = pneg %p145
        $region38: #{tpu_custom_call.1} parent=23 // pred_check_branch
          %413 = sbr.rel (%p411) target = $region40
        $region39: #{tpu_custom_call.1} parent=23 // pred_region
          %s414 = sand.u32 %s31, 1
          %s415 = scalar_lea.sflag [#allocation11], %s414
          %s416 = sand.u32 %s135, 1
          %s417 = smul.addr %s416, 16
          %s418 = scalar_lea.vmem [#allocation10], %s417
          %s420 = ssub.s32 256, 256
          %421 = vsyncadd %s415, %s420
          %s422 = smul.addr %s39, 2
          %s423 = smul.addr %s38, 8
          %s424 = sadd.s32 %s422, %s423
          %s425 = smul.addr %s424, 128
          %s426 = scalar_lea.hbm %s3, %s425
          %s427 = sshll.u32 %s418, 4
          %s428 = int_to_ptr.vmem [resolvable:$true] %s427
          %433 = dma.hbm_to_vmem [thread:$0]  %s426, 256, %s428, %s415, 128, 128, 8
        $region40: #{tpu_custom_call.1} parent=23 // pred_fallthru
          _
        // Predicated region
        $region41: #{tpu_custom_call.1} parent=23 // pred_check
          %p434 = pneg %p171
        $region42: #{tpu_custom_call.1} parent=23 // pred_check_branch
          %436 = sbr.rel (%p434) target = $region44
        $region43: #{tpu_custom_call.1} parent=23 // pred_region
          %s437 = sand.u32 %s31, 1
          %s438 = scalar_lea.sflag [#allocation11], %s437
          %s439 = sand.u32 %s161, 1
          %s440 = smul.addr %s439, 16
          %s441 = scalar_lea.vmem [#allocation12], %s440
          %s443 = ssub.s32 256, 256
          %444 = vsyncadd %s438, %s443
          %s445 = smul.addr %s38, 2
          %s446 = smul.addr %s445, 128
          %s447 = scalar_lea.hbm %s4, %s446
          %s448 = sshll.u32 %s441, 4
          %s449 = int_to_ptr.vmem [resolvable:$true] %s448
          %454 = dma.hbm_to_vmem [thread:$0]  %s447, 256, %s449, %s438, 128, 128, 8
        $region44: #{tpu_custom_call.1} parent=23 // pred_fallthru
          _
        // Predicated region
        $region45: #{tpu_custom_call.1} parent=23 // pred_check
          %p455 = pneg %p199
        $region46: #{tpu_custom_call.1} parent=23 // pred_check_branch
          %457 = sbr.rel (%p455) target = $region48
        $region47: #{tpu_custom_call.1} parent=23 // pred_region
          %s458 = sand.u32 %s31, 1
          %s459 = scalar_lea.sflag [#allocation14], %s458
          %s460 = sand.u32 %s189, 1
          %s461 = smul.addr %s460, 16
          %s462 = scalar_lea.vmem [#allocation13], %s461
          %s464 = ssub.s32 256, 256
          %465 = vsyncadd %s459, %s464
          %s466 = smul.addr %s39, 2
          %s467 = smul.addr %s38, 8
          %s468 = sadd.s32 %s466, %s467
          %s469 = smul.addr %s468, 128
          %s470 = scalar_lea.hbm %s5, %s469
          %s471 = sshll.u32 %s462, 4
          %s472 = int_to_ptr.vmem [resolvable:$true] %s471
          %477 = dma.hbm_to_vmem [thread:$0]  %s470, 256, %s472, %s459, 128, 128, 8
        $region48: #{tpu_custom_call.1} parent=23 // pred_fallthru
          _
        // Predicated region
        $region49: #{tpu_custom_call.1} parent=23 // pred_check
          %p478 = pneg %p227
        $region50: #{tpu_custom_call.1} parent=23 // pred_check_branch
          %480 = sbr.rel (%p478) target = $region52
        $region51: #{tpu_custom_call.1} parent=23 // pred_region
          %s481 = sand.u32 %s31, 1
          %s482 = scalar_lea.sflag [#allocation14], %s481
          %s483 = sand.u32 %s217, 1
          %s484 = smul.addr %s483, 16
          %s485 = scalar_lea.vmem [#allocation15], %s484
          %s487 = ssub.s32 256, 256
          %488 = vsyncadd %s482, %s487
          %s489 = smul.addr %s39, 2
          %s490 = smul.addr %s38, 8
          %s491 = sadd.s32 %s489, %s490
          %s492 = smul.addr %s491, 128
          %s493 = scalar_lea.hbm %s6, %s492
          %s494 = sshll.u32 %s485, 4
          %s495 = int_to_ptr.vmem [resolvable:$true] %s494
          %500 = dma.hbm_to_vmem [thread:$0]  %s493, 256, %s495, %s482, 128, 128, 8
        $region52: #{tpu_custom_call.1} parent=23 // pred_fallthru
          _
      $region24: #{tpu_custom_call.1} parent=5 // pred_fallthru
        _
      %p501 = scmp.le.s32.totalorder 1, %s31
      %p502 = scmp.lt.s32.totalorder %s31, 9
      %p503 = pnand %p501, %p502
      %p504 = pneg %p503
      // Predicated region
      $region53: #{tpu_custom_call.1} parent=5 // pred_check
        _
      $region54: #{tpu_custom_call.1} parent=5 // pred_check_branch
        %506 = sbr.rel (%p503) target = $region56
      $region55: #{tpu_custom_call.1} parent=5 // pred_region
        %s507 = ssub.s32 %s31, 1
        %s508 = sand.u32 %s56, 1
        %s509 = scalar_lea.sflag [#allocation5], %s508
        %s510 = sand.u32 %s56, 1
        %s511 = smul.addr %s510, 16
        %s512 = scalar_lea.vmem [#allocation4], %s511
        // Predicated region
        $region57: #{tpu_custom_call.1} parent=55 // pred_check
          %p513 = pneg %p69
        $region58: #{tpu_custom_call.1} parent=55 // pred_check_branch
          %515 = sbr.rel (%p513) target = $region60
        $region59: #{tpu_custom_call.1} parent=55 // pred_region
          %516 = dma.done %s509, 256
        $region60: #{tpu_custom_call.1} parent=55 // pred_fallthru
          _
        %s517 = sand.u32 %s36, 1
        %s518 = scalar_lea.sflag [#allocation8], %s517
        %s519 = sand.u32 %s82, 1
        %s520 = smul.addr %s519, 16
        %s521 = scalar_lea.vmem [#allocation7], %s520
        // Predicated region
        $region61: #{tpu_custom_call.1} parent=55 // pred_check
          %p522 = pneg %p95
        $region62: #{tpu_custom_call.1} parent=55 // pred_check_branch
          %524 = sbr.rel (%p522) target = $region64
        $region63: #{tpu_custom_call.1} parent=55 // pred_region
          %525 = dma.done %s518, 256
        $region64: #{tpu_custom_call.1} parent=55 // pred_fallthru
          _
        %s526 = sand.u32 %s36, 1
        %s527 = scalar_lea.sflag [#allocation8], %s526
        %s528 = sand.u32 %s110, 1
        %s529 = smul.addr %s528, 16
        %s530 = scalar_lea.vmem [#allocation9], %s529
        // Predicated region
        $region65: #{tpu_custom_call.1} parent=55 // pred_check
          %p531 = pneg %p123
        $region66: #{tpu_custom_call.1} parent=55 // pred_check_branch
          %533 = sbr.rel (%p531) target = $region68
        $region67: #{tpu_custom_call.1} parent=55 // pred_region
          %534 = dma.done %s527, 256
        $region68: #{tpu_custom_call.1} parent=55 // pred_fallthru
          _
        %s535 = sand.u32 %s36, 1
        %s536 = scalar_lea.sflag [#allocation11], %s535
        %s537 = sand.u32 %s138, 1
        %s538 = smul.addr %s537, 16
        %s539 = scalar_lea.vmem [#allocation10], %s538
        // Predicated region
        $region69: #{tpu_custom_call.1} parent=55 // pred_check
          %p540 = pneg %p151
        $region70: #{tpu_custom_call.1} parent=55 // pred_check_branch
          %542 = sbr.rel (%p540) target = $region72
        $region71: #{tpu_custom_call.1} parent=55 // pred_region
          %543 = dma.done %s536, 256
        $region72: #{tpu_custom_call.1} parent=55 // pred_fallthru
          _
        %s544 = sand.u32 %s36, 1
        %s545 = scalar_lea.sflag [#allocation11], %s544
        %s546 = sand.u32 %s164, 1
        %s547 = smul.addr %s546, 16
        %s548 = scalar_lea.vmem [#allocation12], %s547
        // Predicated region
        $region73: #{tpu_custom_call.1} parent=55 // pred_check
          %p549 = pneg %p177
        $region74: #{tpu_custom_call.1} parent=55 // pred_check_branch
          %551 = sbr.rel (%p549) target = $region76
        $region75: #{tpu_custom_call.1} parent=55 // pred_region
          %552 = dma.done %s545, 256
        $region76: #{tpu_custom_call.1} parent=55 // pred_fallthru
          _
        %s553 = sand.u32 %s36, 1
        %s554 = scalar_lea.sflag [#allocation14], %s553
        %s555 = sand.u32 %s192, 1
        %s556 = smul.addr %s555, 16
        %s557 = scalar_lea.vmem [#allocation13], %s556
        // Predicated region
        $region77: #{tpu_custom_call.1} parent=55 // pred_check
          %p558 = pneg %p205
        $region78: #{tpu_custom_call.1} parent=55 // pred_check_branch
          %560 = sbr.rel (%p558) target = $region80
        $region79: #{tpu_custom_call.1} parent=55 // pred_region
          %561 = dma.done %s554, 256
        $region80: #{tpu_custom_call.1} parent=55 // pred_fallthru
          _
        %s562 = sand.u32 %s36, 1
        %s563 = scalar_lea.sflag [#allocation14], %s562
        %s564 = sand.u32 %s220, 1
        %s565 = smul.addr %s564, 16
        %s566 = scalar_lea.vmem [#allocation15], %s565
        // Predicated region
        $region81: #{tpu_custom_call.1} parent=55 // pred_check
          %p567 = pneg %p233
        $region82: #{tpu_custom_call.1} parent=55 // pred_check_branch
          %569 = sbr.rel (%p567) target = $region84
        $region83: #{tpu_custom_call.1} parent=55 // pred_region
          %570 = dma.done %s563, 256
        $region84: #{tpu_custom_call.1} parent=55 // pred_fallthru
          _
        // Predicated region
        $region85: #{tpu_custom_call.1} parent=55 // pred_check
          %p571 = pneg %p254
        $region86: #{tpu_custom_call.1} parent=55 // pred_check_branch
          %573 = sbr.rel (%p571) target = $region88
        $region87: #{tpu_custom_call.1} parent=55 // pred_region
          %574 = dma.done [#allocation17], 1536
        $region88: #{tpu_custom_call.1} parent=55 // pred_fallthru
          _
        // Predicated region
        $region89: #{tpu_custom_call.1} parent=55 // pred_check
          %p575 = pneg %p275
        $region90: #{tpu_custom_call.1} parent=55 // pred_check_branch
          %577 = sbr.rel (%p575) target = $region92
        $region91: #{tpu_custom_call.1} parent=55 // pred_region
          %578 = dma.done [#allocation17], 1536
        $region92: #{tpu_custom_call.1} parent=55 // pred_fallthru
          _
        %s579 = sand.u32 %s56, 1
        %s580 = scalar_lea.sflag [#allocation5], %s579
        %s581 = sand.u32 %s56, 1
        %s582 = smul.addr %s581, 16
        %s583 = scalar_lea.vmem [#allocation4], %s582
        %p584 = pneg %p69
        %p585 = pneg %p66
        %s586 = sand.u32 %s36, 1
        %s587 = scalar_lea.sflag [#allocation8], %s586
        %s588 = sand.u32 %s82, 1
        %s589 = smul.addr %s588, 16
        %s590 = scalar_lea.vmem [#allocation7], %s589
        %p591 = pneg %p95
        %p592 = pneg %p92
        %s593 = sand.u32 %s36, 1
        %s594 = scalar_lea.sflag [#allocation8], %s593
        %s595 = sand.u32 %s110, 1
        %s596 = smul.addr %s595, 16
        %s597 = scalar_lea.vmem [#allocation9], %s596
        %p598 = pneg %p123
        %p599 = pneg %p120
        %s600 = sand.u32 %s36, 1
        %s601 = scalar_lea.sflag [#allocation11], %s600
        %s602 = sand.u32 %s138, 1
        %s603 = smul.addr %s602, 16
        %s604 = scalar_lea.vmem [#allocation10], %s603
        %p605 = pneg %p151
        %p606 = pneg %p148
        %s607 = sand.u32 %s36, 1
        %s608 = scalar_lea.sflag [#allocation11], %s607
        %s609 = sand.u32 %s164, 1
        %s610 = smul.addr %s609, 16
        %s611 = scalar_lea.vmem [#allocation12], %s610
        %p612 = pneg %p177
        %p613 = pneg %p174
        %s614 = sand.u32 %s36, 1
        %s615 = scalar_lea.sflag [#allocation14], %s614
        %s616 = sand.u32 %s192, 1
        %s617 = smul.addr %s616, 16
        %s618 = scalar_lea.vmem [#allocation13], %s617
        %p619 = pneg %p205
        %p620 = pneg %p202
        %s621 = sand.u32 %s36, 1
        %s622 = scalar_lea.sflag [#allocation14], %s621
        %s623 = sand.u32 %s220, 1
        %s624 = smul.addr %s623, 16
        %s625 = scalar_lea.vmem [#allocation15], %s624
        %p626 = pneg %p233
        %p627 = pneg %p230
        %p628 = pneg %p254
        %p629 = pneg %p251
        %p630 = pneg %p275
        %p631 = pneg %p272
        %p632 = pneg %p301
        %p633 = pneg %p298
        %s634 = sand.u32 %s288, 1
        %s635 = scalar_lea.sflag [#allocation6], %s634
        %s636 = sand.u32 %s288, 1
        %s637 = smul.addr %s636, 32
        %s638 = scalar_lea.vmem [#allocation19], %s637
        %p639 = scmp.eq.s32.totalorder %s41, 0
        // Predicated region
        $region93: #{tpu_custom_call.1} parent=55 // pred_check
          %p640 = pneg %p639
        $region94: #{tpu_custom_call.1} parent=55 // pred_check_branch
          %642 = sbr.rel (%p640) target = $region96
        $region95: #{tpu_custom_call.1} parent=55 // pred_region
          %vm643 = vcmask 130048
          %644 = vst.msk [vmem:[#allocation2] sm:$0xff] %vm643, 0.0
          %645 = vst.msk [vmem:[#allocation2 + $0x8] sm:$0xff] %vm643, 0.0
          %646 = vst.msk [vmem:[#allocation3] sm:$0xff] %vm643, 0.0
          %647 = vst.msk [vmem:[#allocation3 + $0x8] sm:$0xff] %vm643, 0.0
        $region96: #{tpu_custom_call.1} parent=55 // pred_fallthru
          _
        %v648 = vld [vmem:[%s512] sm:$0xff]
        %v649 = vld [vmem:[%s512 + $0x8] sm:$0xff]
        %v650 = vld [vmem:[%s521] sm:$0xff]
        %v651 = vld [vmem:[%s521 + $0x8] sm:$0xff]
        %v652 = vld [vmem:[%s548] sm:$0xff]
        %v653 = vld [vmem:[%s548 + $0x8] sm:$0xff]
        %v654 = vmul.f32 %v652, %v652
        %v655 = vmul.f32 %v653, %v653
        %v656 = vld [vmem:[#allocation16] sm:$0xff]
        %v657 = vld [vmem:[#allocation16 + $0x8] sm:$0xff]
        %s658 = scalar_lea.vmem [#allocation16], 16
        %v659 = vld [vmem:[%s658] sm:$0xff]
        %v660 = vld [vmem:[%s658 + $0x8] sm:$0xff]
        %s661 = scalar_lea.vmem [#allocation16], 32
        %v662 = vld [vmem:[%s661] sm:$0xff]
        %v663 = vld [vmem:[%s661 + $0x8] sm:$0xff]
        %s664 = scalar_lea.vmem [#allocation16], 48
        %v665 = vld [vmem:[%s664] sm:$0xff]
        %v666 = vld [vmem:[%s664 + $0x8] sm:$0xff]
        %s667 = scalar_lea.vmem [#allocation16], 64
        %v668 = vld [vmem:[%s667] sm:$0xff]
        %v669 = vld [vmem:[%s667 + $0x8] sm:$0xff]
        %s670 = scalar_lea.vmem [#allocation16], 80
        %v671 = vld [vmem:[%s670] sm:$0xff]
        %v672 = vld [vmem:[%s670 + $0x8] sm:$0xff]
        %v673 = vld [vmem:[#allocation18] sm:$0xff]
        %v674 = vld [vmem:[#allocation18 + $0x8] sm:$0xff]
        %s675 = scalar_lea.vmem [#allocation18], 16
        %v676 = vld [vmem:[%s675] sm:$0xff]
        %v677 = vld [vmem:[%s675 + $0x8] sm:$0xff]
        %s678 = scalar_lea.vmem [#allocation18], 32
        %v679 = vld [vmem:[%s678] sm:$0xff]
        %v680 = vld [vmem:[%s678 + $0x8] sm:$0xff]
        %s681 = scalar_lea.vmem [#allocation18], 48
        %v682 = vld [vmem:[%s681] sm:$0xff]
        %v683 = vld [vmem:[%s681 + $0x8] sm:$0xff]
        %s684 = scalar_lea.vmem [#allocation18], 64
        %v685 = vld [vmem:[%s684] sm:$0xff]
        %v686 = vld [vmem:[%s684 + $0x8] sm:$0xff]
        %s687 = scalar_lea.vmem [#allocation18], 80
        %v688 = vld [vmem:[%s687] sm:$0xff]
        %v689 = vld [vmem:[%s687 + $0x8] sm:$0xff]
        %v690 = vld [vmem:[%s557] sm:$0xff]
        %v691 = vld [vmem:[%s557 + $0x8] sm:$0xff]
        %v692 = vld [vmem:[%s566] sm:$0xff]
        %v693 = vld [vmem:[%s566 + $0x8] sm:$0xff]
        %v694 = vmul.f32 %v648, %v690
        %v695 = vmul.f32 %v649, %v691
        %v696 = vmul.f32 %v650, %v692
        %v697 = vmul.f32 %v651, %v693
        %v698 = vsub.f32 %v694, %v696
        %v699 = vsub.f32 %v695, %v697
        %v700 = vmul.f32 %v648, %v692
        %v701 = vmul.f32 %v649, %v693
        %v702 = vmul.f32 %v650, %v690
        %v703 = vmul.f32 %v651, %v691
        %v704 = vadd.f32 %v700, %v702
        %v705 = vadd.f32 %v701, %v703
        %vm706 = vcmask 130048
        %v708 = vsel %vm706, %v656, 0
        %v711 = vsel %vm706, %v657, 0
        %713 = vmatprep.subr.mxu0 0.0
        %714 = vmatpush1.msra.mxu0 %v698
        %715 = vmatprep.subr.mxu0 0.0
        %716 = vmatpush1.msra.mxu0 %v699
        %717 = vmatprep.subr.mxu0 0.0
        %718 = vmatpush1.msra.mxu0 0.0
        %719 = vmatprep.subr.mxu0 0.0
        %720 = vmatpush1.msra.mxu0 0.0
        %721 = vmatprep.subr.mxu0 0.0
        %722 = vmatpush1.msra.mxu0 0.0
        %723 = vmatprep.subr.mxu0 0.0
        %724 = vmatpush1.msra.mxu0 0.0
        %725 = vmatprep.subr.mxu0 0.0
        %726 = vmatpush1.msra.mxu0 0.0
        %727 = vmatprep.subr.mxu0 0.0
        %728 = vmatpush1.msra.mxu0 0.0
        %729 = vmatprep.subr.mxu0 0.0
        %730 = vmatpush1.msra.mxu0 0.0
        %731 = vmatprep.subr.mxu0 0.0
        %732 = vmatpush1.msra.mxu0 0.0
        %733 = vmatprep.subr.mxu0 0.0
        %734 = vmatpush1.msra.mxu0 0.0
        %735 = vmatprep.subr.mxu0 0.0
        %736 = vmatpush1.msra.mxu0 0.0
        %737 = vmatprep.subr.mxu0 0.0
        %738 = vmatpush1.msra.mxu0 0.0
        %739 = vmatprep.subr.mxu0 0.0
        %740 = vmatpush1.msra.mxu0 0.0
        %741 = vmatprep.subr.mxu0 0.0
        %742 = vmatpush1.msra.mxu0 0.0
        %743 = vmatprep.subr.mxu0 0.0
        %744 = vmatpush1.msra.mxu0 0.0
        %745 = vmatprep.subr.mxu0 0.0
        %746 = vmatpush1.msra.mxu0 0.0
        %747 = vmatprep.subr.mxu0 0.0
        %748 = vmatpush1.msra.mxu0 0.0
        %749 = vmatprep.subr.mxu0 0.0
        %750 = vmatpush1.msra.mxu0 0.0
        %751 = vmatprep.subr.mxu0 0.0
        %752 = vmatpush1.msra.mxu0 0.0
        %753 = vmatprep.subr.mxu0 0.0
        %754 = vmatpush1.msra.mxu0 0.0
        %755 = vmatprep.subr.mxu0 0.0
        %756 = vmatpush1.msra.mxu0 0.0
        %757 = vmatprep.subr.mxu0 0.0
        %758 = vmatpush1.msra.mxu0 0.0
        %759 = vmatprep.subr.mxu0 0.0
        %760 = vmatpush1.msra.mxu0 0.0
        %761 = vmatprep.subr.mxu0 0.0
        %762 = vmatpush1.msra.mxu0 0.0
        %763 = vmatprep.subr.mxu0 0.0
        %764 = vmatpush1.msra.mxu0 0.0
        %765 = vmatprep.subr.mxu0 0.0
        %766 = vmatpush1.msra.mxu0 0.0
        %767 = vmatprep.subr.mxu0 0.0
        %768 = vmatpush1.msra.mxu0 0.0
        %769 = vmatprep.subr.mxu0 0.0
        %770 = vmatpush1.msra.mxu0 0.0
        %771 = vmatprep.subr.mxu0 0.0
        %772 = vmatpush1.msra.mxu0 0.0
        %773 = vmatprep.subr.mxu0 0.0
        %774 = vmatpush1.msra.mxu0 0.0
        %775 = vmatprep.subr.mxu0 0.0
        %776 = vmatpush1.msra.mxu0 0.0
        %777 = vmatprep.mubr.f32.mxu0 0.0
        %778 = vmatmul.mubr.f32.gmra.mrb[0].mxu0 %v708
        %v779 = vpop.f32.mrb[0].mxu0
        %v780 = vadd.f32 0.0, %v779
        %v781 = vpop.f32.mrb[0].mxu0
        %782 = vmatprep.mubr.f32.mxu0 0.0
        %783 = vmatmul.mubr.f32.gmra.mrb[0].mxu0 %v711
        %v784 = vpop.f32.mrb[0].mxu0
        %v785 = vadd.f32 0.0, %v784
        %v786 = vpop.f32.mrb[0].mxu0
        %787 = vdwg.mxu0
        %v789 = vsel %vm706, %v659, 0
        %v792 = vsel %vm706, %v660, 0
        %794 = vmatprep.subr.mxu0 0.0
        %795 = vmatpush1.msra.mxu0 %v704
        %796 = vmatprep.subr.mxu0 0.0
        %797 = vmatpush1.msra.mxu0 %v705
        %798 = vmatprep.subr.mxu0 0.0
        %799 = vmatpush1.msra.mxu0 0.0
        %800 = vmatprep.subr.mxu0 0.0
        %801 = vmatpush1.msra.mxu0 0.0
        %802 = vmatprep.subr.mxu0 0.0
        %803 = vmatpush1.msra.mxu0 0.0
        %804 = vmatprep.subr.mxu0 0.0
        %805 = vmatpush1.msra.mxu0 0.0
        %806 = vmatprep.subr.mxu0 0.0
        %807 = vmatpush1.msra.mxu0 0.0
        %808 = vmatprep.subr.mxu0 0.0
        %809 = vmatpush1.msra.mxu0 0.0
        %810 = vmatprep.subr.mxu0 0.0
        %811 = vmatpush1.msra.mxu0 0.0
        %812 = vmatprep.subr.mxu0 0.0
        %813 = vmatpush1.msra.mxu0 0.0
        %814 = vmatprep.subr.mxu0 0.0
        %815 = vmatpush1.msra.mxu0 0.0
        %816 = vmatprep.subr.mxu0 0.0
        %817 = vmatpush1.msra.mxu0 0.0
        %818 = vmatprep.subr.mxu0 0.0
        %819 = vmatpush1.msra.mxu0 0.0
        %820 = vmatprep.subr.mxu0 0.0
        %821 = vmatpush1.msra.mxu0 0.0
        %822 = vmatprep.subr.mxu0 0.0
        %823 = vmatpush1.msra.mxu0 0.0
        %824 = vmatprep.subr.mxu0 0.0
        %825 = vmatpush1.msra.mxu0 0.0
        %826 = vmatprep.subr.mxu0 0.0
        %827 = vmatpush1.msra.mxu0 0.0
        %828 = vmatprep.subr.mxu0 0.0
        %829 = vmatpush1.msra.mxu0 0.0
        %830 = vmatprep.subr.mxu0 0.0
        %831 = vmatpush1.msra.mxu0 0.0
        %832 = vmatprep.subr.mxu0 0.0
        %833 = vmatpush1.msra.mxu0 0.0
        %834 = vmatprep.subr.mxu0 0.0
        %835 = vmatpush1.msra.mxu0 0.0
        %836 = vmatprep.subr.mxu0 0.0
        %837 = vmatpush1.msra.mxu0 0.0
        %838 = vmatprep.subr.mxu0 0.0
        %839 = vmatpush1.msra.mxu0 0.0
        %840 = vmatprep.subr.mxu0 0.0
        %841 = vmatpush1.msra.mxu0 0.0
        %842 = vmatprep.subr.mxu0 0.0
        %843 = vmatpush1.msra.mxu0 0.0
        %844 = vmatprep.subr.mxu0 0.0
        %845 = vmatpush1.msra.mxu0 0.0
        %846 = vmatprep.subr.mxu0 0.0
        %847 = vmatpush1.msra.mxu0 0.0
        %848 = vmatprep.subr.mxu0 0.0
        %849 = vmatpush1.msra.mxu0 0.0
        %850 = vmatprep.subr.mxu0 0.0
        %851 = vmatpush1.msra.mxu0 0.0
        %852 = vmatprep.subr.mxu0 0.0
        %853 = vmatpush1.msra.mxu0 0.0
        %854 = vmatprep.subr.mxu0 0.0
        %855 = vmatpush1.msra.mxu0 0.0
        %856 = vmatprep.subr.mxu0 0.0
        %857 = vmatpush1.msra.mxu0 0.0
        %858 = vmatprep.mubr.f32.mxu0 0.0
        %859 = vmatmul.mubr.f32.gmra.mrb[0].mxu0 %v789
        %v860 = vpop.f32.mrb[0].mxu0
        %v861 = vadd.f32 0.0, %v860
        %v862 = vpop.f32.mrb[0].mxu0
        %863 = vmatprep.mubr.f32.mxu0 0.0
        %864 = vmatmul.mubr.f32.gmra.mrb[0].mxu0 %v792
        %v865 = vpop.f32.mrb[0].mxu0
        %v866 = vadd.f32 0.0, %v865
        %v867 = vpop.f32.mrb[0].mxu0
        %868 = vdwg.mxu0
        %v869 = vadd.f32 %v698, %v704
        %v870 = vadd.f32 %v699, %v705
        %v872 = vsel %vm706, %v662, 0
        %v875 = vsel %vm706, %v663, 0
        %877 = vmatprep.subr.mxu0 0.0
        %878 = vmatpush1.msra.mxu0 %v869
        %879 = vmatprep.subr.mxu0 0.0
        %880 = vmatpush1.msra.mxu0 %v870
        %881 = vmatprep.subr.mxu0 0.0
        %882 = vmatpush1.msra.mxu0 0.0
        %883 = vmatprep.subr.mxu0 0.0
        %884 = vmatpush1.msra.mxu0 0.0
        %885 = vmatprep.subr.mxu0 0.0
        %886 = vmatpush1.msra.mxu0 0.0
        %887 = vmatprep.subr.mxu0 0.0
        %888 = vmatpush1.msra.mxu0 0.0
        %889 = vmatprep.subr.mxu0 0.0
        %890 = vmatpush1.msra.mxu0 0.0
        %891 = vmatprep.subr.mxu0 0.0
        %892 = vmatpush1.msra.mxu0 0.0
        %893 = vmatprep.subr.mxu0 0.0
        %894 = vmatpush1.msra.mxu0 0.0
        %895 = vmatprep.subr.mxu0 0.0
        %896 = vmatpush1.msra.mxu0 0.0
        %897 = vmatprep.subr.mxu0 0.0
        %898 = vmatpush1.msra.mxu0 0.0
        %899 = vmatprep.subr.mxu0 0.0
        %900 = vmatpush1.msra.mxu0 0.0
        %901 = vmatprep.subr.mxu0 0.0
        %902 = vmatpush1.msra.mxu0 0.0
        %903 = vmatprep.subr.mxu0 0.0
        %904 = vmatpush1.msra.mxu0 0.0
        %905 = vmatprep.subr.mxu0 0.0
        %906 = vmatpush1.msra.mxu0 0.0
        %907 = vmatprep.subr.mxu0 0.0
        %908 = vmatpush1.msra.mxu0 0.0
        %909 = vmatprep.subr.mxu0 0.0
        %910 = vmatpush1.msra.mxu0 0.0
        %911 = vmatprep.subr.mxu0 0.0
        %912 = vmatpush1.msra.mxu0 0.0
        %913 = vmatprep.subr.mxu0 0.0
        %914 = vmatpush1.msra.mxu0 0.0
        %915 = vmatprep.subr.mxu0 0.0
        %916 = vmatpush1.msra.mxu0 0.0
        %917 = vmatprep.subr.mxu0 0.0
        %918 = vmatpush1.msra.mxu0 0.0
        %919 = vmatprep.subr.mxu0 0.0
        %920 = vmatpush1.msra.mxu0 0.0
        %921 = vmatprep.subr.mxu0 0.0
        %922 = vmatpush1.msra.mxu0 0.0
        %923 = vmatprep.subr.mxu0 0.0
        %924 = vmatpush1.msra.mxu0 0.0
        %925 = vmatprep.subr.mxu0 0.0
        %926 = vmatpush1.msra.mxu0 0.0
        %927 = vmatprep.subr.mxu0 0.0
        %928 = vmatpush1.msra.mxu0 0.0
        %929 = vmatprep.subr.mxu0 0.0
        %930 = vmatpush1.msra.mxu0 0.0
        %931 = vmatprep.subr.mxu0 0.0
        %932 = vmatpush1.msra.mxu0 0.0
        %933 = vmatprep.subr.mxu0 0.0
        %934 = vmatpush1.msra.mxu0 0.0
        %935 = vmatprep.subr.mxu0 0.0
        %936 = vmatpush1.msra.mxu0 0.0
        %937 = vmatprep.subr.mxu0 0.0
        %938 = vmatpush1.msra.mxu0 0.0
        %939 = vmatprep.subr.mxu0 0.0
        %940 = vmatpush1.msra.mxu0 0.0
        %941 = vmatprep.mubr.f32.mxu0 0.0
        %942 = vmatmul.mubr.f32.gmra.mrb[0].mxu0 %v872
        %v943 = vpop.f32.mrb[0].mxu0
        %v944 = vadd.f32 0.0, %v943
        %v945 = vpop.f32.mrb[0].mxu0
        %946 = vmatprep.mubr.f32.mxu0 0.0
        %947 = vmatmul.mubr.f32.gmra.mrb[0].mxu0 %v875
        %v948 = vpop.f32.mrb[0].mxu0
        %v949 = vadd.f32 0.0, %v948
        %v950 = vpop.f32.mrb[0].mxu0
        %951 = vdwg.mxu0
        %v952 = vsub.f32 %v780, %v861
        %v953 = vsub.f32 %v785, %v866
        %v954 = vsub.f32 %v944, %v780
        %v955 = vsub.f32 %v949, %v785
        %v956 = vsub.f32 %v954, %v861
        %v957 = vsub.f32 %v955, %v866
        %v959 = vsel %vm706, %v952, 0
        %v962 = vsel %vm706, %v953, 0
        %964 = vmatprep.subr.mxu0 0.0
        %965 = vmatpush1.msra.mxu0 %v673
        %966 = vmatprep.subr.mxu0 0.0
        %967 = vmatpush1.msra.mxu0 %v674
        %968 = vmatprep.subr.mxu0 0.0
        %969 = vmatpush1.msra.mxu0 0.0
        %970 = vmatprep.subr.mxu0 0.0
        %971 = vmatpush1.msra.mxu0 0.0
        %972 = vmatprep.subr.mxu0 0.0
        %973 = vmatpush1.msra.mxu0 0.0
        %974 = vmatprep.subr.mxu0 0.0
        %975 = vmatpush1.msra.mxu0 0.0
        %976 = vmatprep.subr.mxu0 0.0
        %977 = vmatpush1.msra.mxu0 0.0
        %978 = vmatprep.subr.mxu0 0.0
        %979 = vmatpush1.msra.mxu0 0.0
        %980 = vmatprep.subr.mxu0 0.0
        %981 = vmatpush1.msra.mxu0 0.0
        %982 = vmatprep.subr.mxu0 0.0
        %983 = vmatpush1.msra.mxu0 0.0
        %984 = vmatprep.subr.mxu0 0.0
        %985 = vmatpush1.msra.mxu0 0.0
        %986 = vmatprep.subr.mxu0 0.0
        %987 = vmatpush1.msra.mxu0 0.0
        %988 = vmatprep.subr.mxu0 0.0
        %989 = vmatpush1.msra.mxu0 0.0
        %990 = vmatprep.subr.mxu0 0.0
        %991 = vmatpush1.msra.mxu0 0.0
        %992 = vmatprep.subr.mxu0 0.0
        %993 = vmatpush1.msra.mxu0 0.0
        %994 = vmatprep.subr.mxu0 0.0
        %995 = vmatpush1.msra.mxu0 0.0
        %996 = vmatprep.subr.mxu0 0.0
        %997 = vmatpush1.msra.mxu0 0.0
        %998 = vmatprep.subr.mxu0 0.0
        %999 = vmatpush1.msra.mxu0 0.0
        %1000 = vmatprep.subr.mxu0 0.0
        %1001 = vmatpush1.msra.mxu0 0.0
        %1002 = vmatprep.subr.mxu0 0.0
        %1003 = vmatpush1.msra.mxu0 0.0
        %1004 = vmatprep.subr.mxu0 0.0
        %1005 = vmatpush1.msra.mxu0 0.0
        %1006 = vmatprep.subr.mxu0 0.0
        %1007 = vmatpush1.msra.mxu0 0.0
        %1008 = vmatprep.subr.mxu0 0.0
        %1009 = vmatpush1.msra.mxu0 0.0
        %1010 = vmatprep.subr.mxu0 0.0
        %1011 = vmatpush1.msra.mxu0 0.0
        %1012 = vmatprep.subr.mxu0 0.0
        %1013 = vmatpush1.msra.mxu0 0.0
        %1014 = vmatprep.subr.mxu0 0.0
        %1015 = vmatpush1.msra.mxu0 0.0
        %1016 = vmatprep.subr.mxu0 0.0
        %1017 = vmatpush1.msra.mxu0 0.0
        %1018 = vmatprep.subr.mxu0 0.0
        %1019 = vmatpush1.msra.mxu0 0.0
        %1020 = vmatprep.subr.mxu0 0.0
        %1021 = vmatpush1.msra.mxu0 0.0
        %1022 = vmatprep.subr.mxu0 0.0
        %1023 = vmatpush1.msra.mxu0 0.0
        %1024 = vmatprep.subr.mxu0 0.0
        %1025 = vmatpush1.msra.mxu0 0.0
        %1026 = vmatprep.subr.mxu0 0.0
        %1027 = vmatpush1.msra.mxu0 0.0
        %1028 = vmatprep.mubr.f32.mxu0 0.0
        %1029 = vmatmul.mubr.f32.gmra.mrb[0].mxu0 %v959
        %v1030 = vpop.f32.mrb[0].mxu0
        %v1031 = vadd.f32 0.0, %v1030
        %v1032 = vpop.f32.mrb[0].mxu0
        %1033 = vmatprep.mubr.f32.mxu0 0.0
        %1034 = vmatmul.mubr.f32.gmra.mrb[0].mxu0 %v962
        %v1035 = vpop.f32.mrb[0].mxu0
        %v1036 = vadd.f32 0.0, %v1035
        %v1037 = vpop.f32.mrb[0].mxu0
        %1038 = vdwg.mxu0
        %v1040 = vsel %vm706, %v956, 0
        %v1043 = vsel %vm706, %v957, 0
        %1045 = vmatprep.subr.mxu0 0.0
        %1046 = vmatpush1.msra.mxu0 %v676
        %1047 = vmatprep.subr.mxu0 0.0
        %1048 = vmatpush1.msra.mxu0 %v677
        %1049 = vmatprep.subr.mxu0 0.0
        %1050 = vmatpush1.msra.mxu0 0.0
        %1051 = vmatprep.subr.mxu0 0.0
        %1052 = vmatpush1.msra.mxu0 0.0
        %1053 = vmatprep.subr.mxu0 0.0
        %1054 = vmatpush1.msra.mxu0 0.0
        %1055 = vmatprep.subr.mxu0 0.0
        %1056 = vmatpush1.msra.mxu0 0.0
        %1057 = vmatprep.subr.mxu0 0.0
        %1058 = vmatpush1.msra.mxu0 0.0
        %1059 = vmatprep.subr.mxu0 0.0
        %1060 = vmatpush1.msra.mxu0 0.0
        %1061 = vmatprep.subr.mxu0 0.0
        %1062 = vmatpush1.msra.mxu0 0.0
        %1063 = vmatprep.subr.mxu0 0.0
        %1064 = vmatpush1.msra.mxu0 0.0
        %1065 = vmatprep.subr.mxu0 0.0
        %1066 = vmatpush1.msra.mxu0 0.0
        %1067 = vmatprep.subr.mxu0 0.0
        %1068 = vmatpush1.msra.mxu0 0.0
        %1069 = vmatprep.subr.mxu0 0.0
        %1070 = vmatpush1.msra.mxu0 0.0
        %1071 = vmatprep.subr.mxu0 0.0
        %1072 = vmatpush1.msra.mxu0 0.0
        %1073 = vmatprep.subr.mxu0 0.0
        %1074 = vmatpush1.msra.mxu0 0.0
        %1075 = vmatprep.subr.mxu0 0.0
        %1076 = vmatpush1.msra.mxu0 0.0
        %1077 = vmatprep.subr.mxu0 0.0
        %1078 = vmatpush1.msra.mxu0 0.0
        %1079 = vmatprep.subr.mxu0 0.0
        %1080 = vmatpush1.msra.mxu0 0.0
        %1081 = vmatprep.subr.mxu0 0.0
        %1082 = vmatpush1.msra.mxu0 0.0
        %1083 = vmatprep.subr.mxu0 0.0
        %1084 = vmatpush1.msra.mxu0 0.0
        %1085 = vmatprep.subr.mxu0 0.0
        %1086 = vmatpush1.msra.mxu0 0.0
        %1087 = vmatprep.subr.mxu0 0.0
        %1088 = vmatpush1.msra.mxu0 0.0
        %1089 = vmatprep.subr.mxu0 0.0
        %1090 = vmatpush1.msra.mxu0 0.0
        %1091 = vmatprep.subr.mxu0 0.0
        %1092 = vmatpush1.msra.mxu0 0.0
        %1093 = vmatprep.subr.mxu0 0.0
        %1094 = vmatpush1.msra.mxu0 0.0
        %1095 = vmatprep.subr.mxu0 0.0
        %1096 = vmatpush1.msra.mxu0 0.0
        %1097 = vmatprep.subr.mxu0 0.0
        %1098 = vmatpush1.msra.mxu0 0.0
        %1099 = vmatprep.subr.mxu0 0.0
        %1100 = vmatpush1.msra.mxu0 0.0
        %1101 = vmatprep.subr.mxu0 0.0
        %1102 = vmatpush1.msra.mxu0 0.0
        %1103 = vmatprep.subr.mxu0 0.0
        %1104 = vmatpush1.msra.mxu0 0.0
        %1105 = vmatprep.subr.mxu0 0.0
        %1106 = vmatpush1.msra.mxu0 0.0
        %1107 = vmatprep.subr.mxu0 0.0
        %1108 = vmatpush1.msra.mxu0 0.0
        %1109 = vmatprep.mubr.f32.mxu0 0.0
        %1110 = vmatmul.mubr.f32.gmra.mrb[0].mxu0 %v1040
        %v1111 = vpop.f32.mrb[0].mxu0
        %v1112 = vadd.f32 0.0, %v1111
        %v1113 = vpop.f32.mrb[0].mxu0
        %1114 = vmatprep.mubr.f32.mxu0 0.0
        %1115 = vmatmul.mubr.f32.gmra.mrb[0].mxu0 %v1043
        %v1116 = vpop.f32.mrb[0].mxu0
        %v1117 = vadd.f32 0.0, %v1116
        %v1118 = vpop.f32.mrb[0].mxu0
        %1119 = vdwg.mxu0
        %v1120 = vadd.f32 %v952, %v956
        %v1121 = vadd.f32 %v953, %v957
        %v1123 = vsel %vm706, %v1120, 0
        %v1126 = vsel %vm706, %v1121, 0
        %1128 = vmatprep.subr.mxu0 0.0
        %1129 = vmatpush1.msra.mxu0 %v679
        %1130 = vmatprep.subr.mxu0 0.0
        %1131 = vmatpush1.msra.mxu0 %v680
        %1132 = vmatprep.subr.mxu0 0.0
        %1133 = vmatpush1.msra.mxu0 0.0
        %1134 = vmatprep.subr.mxu0 0.0
        %1135 = vmatpush1.msra.mxu0 0.0
        %1136 = vmatprep.subr.mxu0 0.0
        %1137 = vmatpush1.msra.mxu0 0.0
        %1138 = vmatprep.subr.mxu0 0.0
        %1139 = vmatpush1.msra.mxu0 0.0
        %1140 = vmatprep.subr.mxu0 0.0
        %1141 = vmatpush1.msra.mxu0 0.0
        %1142 = vmatprep.subr.mxu0 0.0
        %1143 = vmatpush1.msra.mxu0 0.0
        %1144 = vmatprep.subr.mxu0 0.0
        %1145 = vmatpush1.msra.mxu0 0.0
        %1146 = vmatprep.subr.mxu0 0.0
        %1147 = vmatpush1.msra.mxu0 0.0
        %1148 = vmatprep.subr.mxu0 0.0
        %1149 = vmatpush1.msra.mxu0 0.0
        %1150 = vmatprep.subr.mxu0 0.0
        %1151 = vmatpush1.msra.mxu0 0.0
        %1152 = vmatprep.subr.mxu0 0.0
        %1153 = vmatpush1.msra.mxu0 0.0
        %1154 = vmatprep.subr.mxu0 0.0
        %1155 = vmatpush1.msra.mxu0 0.0
        %1156 = vmatprep.subr.mxu0 0.0
        %1157 = vmatpush1.msra.mxu0 0.0
        %1158 = vmatprep.subr.mxu0 0.0
        %1159 = vmatpush1.msra.mxu0 0.0
        %1160 = vmatprep.subr.mxu0 0.0
        %1161 = vmatpush1.msra.mxu0 0.0
        %1162 = vmatprep.subr.mxu0 0.0
        %1163 = vmatpush1.msra.mxu0 0.0
        %1164 = vmatprep.subr.mxu0 0.0
        %1165 = vmatpush1.msra.mxu0 0.0
        %1166 = vmatprep.subr.mxu0 0.0
        %1167 = vmatpush1.msra.mxu0 0.0
        %1168 = vmatprep.subr.mxu0 0.0
        %1169 = vmatpush1.msra.mxu0 0.0
        %1170 = vmatprep.subr.mxu0 0.0
        %1171 = vmatpush1.msra.mxu0 0.0
        %1172 = vmatprep.subr.mxu0 0.0
        %1173 = vmatpush1.msra.mxu0 0.0
        %1174 = vmatprep.subr.mxu0 0.0
        %1175 = vmatpush1.msra.mxu0 0.0
        %1176 = vmatprep.subr.mxu0 0.0
        %1177 = vmatpush1.msra.mxu0 0.0
        %1178 = vmatprep.subr.mxu0 0.0
        %1179 = vmatpush1.msra.mxu0 0.0
        %1180 = vmatprep.subr.mxu0 0.0
        %1181 = vmatpush1.msra.mxu0 0.0
        %1182 = vmatprep.subr.mxu0 0.0
        %1183 = vmatpush1.msra.mxu0 0.0
        %1184 = vmatprep.subr.mxu0 0.0
        %1185 = vmatpush1.msra.mxu0 0.0
        %1186 = vmatprep.subr.mxu0 0.0
        %1187 = vmatpush1.msra.mxu0 0.0
        %1188 = vmatprep.subr.mxu0 0.0
        %1189 = vmatpush1.msra.mxu0 0.0
        %1190 = vmatprep.subr.mxu0 0.0
        %1191 = vmatpush1.msra.mxu0 0.0
        %1192 = vmatprep.mubr.f32.mxu0 0.0
        %1193 = vmatmul.mubr.f32.gmra.mrb[0].mxu0 %v1123
        %v1194 = vpop.f32.mrb[0].mxu0
        %v1195 = vadd.f32 0.0, %v1194
        %v1196 = vpop.f32.mrb[0].mxu0
        %1197 = vmatprep.mubr.f32.mxu0 0.0
        %1198 = vmatmul.mubr.f32.gmra.mrb[0].mxu0 %v1126
        %v1199 = vpop.f32.mrb[0].mxu0
        %v1200 = vadd.f32 0.0, %v1199
        %v1201 = vpop.f32.mrb[0].mxu0
        %1202 = vdwg.mxu0
        %v1203 = vsub.f32 %v1031, %v1112
        %v1204 = vsub.f32 %v1036, %v1117
        %v1205 = vsub.f32 %v1195, %v1031
        %v1206 = vsub.f32 %v1200, %v1036
        %v1207 = vsub.f32 %v1205, %v1112
        %v1208 = vsub.f32 %v1206, %v1117
        %v1209 = vld [vmem:[%s530] sm:$0xff]
        %v1210 = vld [vmem:[%s530 + $0x8] sm:$0xff]
        %v1211 = vmul.f32 %v1203, %v652
        %v1212 = vmul.f32 %v1204, %v653
        %v1213 = vsub.f32 %v1209, %v1211
        %v1214 = vsub.f32 %v1210, %v1212
        %v1215 = vmul.f32 %v1213, %v654
        %v1216 = vmul.f32 %v1214, %v655
        %v1217 = vld [vmem:[%s539] sm:$0xff]
        %v1218 = vld [vmem:[%s539 + $0x8] sm:$0xff]
        %v1219 = vmul.f32 %v1207, %v652
        %v1220 = vmul.f32 %v1208, %v653
        %v1221 = vsub.f32 %v1217, %v1219
        %v1222 = vsub.f32 %v1218, %v1220
        %v1223 = vmul.f32 %v1221, %v654
        %v1224 = vmul.f32 %v1222, %v655
        %v1226 = vsel %vm706, %v665, 0
        %v1229 = vsel %vm706, %v666, 0
        %1231 = vmatprep.subr.mxu0 0.0
        %1232 = vmatpush1.msra.mxu0 %v1215
        %1233 = vmatprep.subr.mxu0 0.0
        %1234 = vmatpush1.msra.mxu0 %v1216
        %1235 = vmatprep.subr.mxu0 0.0
        %1236 = vmatpush1.msra.mxu0 0.0
        %1237 = vmatprep.subr.mxu0 0.0
        %1238 = vmatpush1.msra.mxu0 0.0
        %1239 = vmatprep.subr.mxu0 0.0
        %1240 = vmatpush1.msra.mxu0 0.0
        %1241 = vmatprep.subr.mxu0 0.0
        %1242 = vmatpush1.msra.mxu0 0.0
        %1243 = vmatprep.subr.mxu0 0.0
        %1244 = vmatpush1.msra.mxu0 0.0
        %1245 = vmatprep.subr.mxu0 0.0
        %1246 = vmatpush1.msra.mxu0 0.0
        %1247 = vmatprep.subr.mxu0 0.0
        %1248 = vmatpush1.msra.mxu0 0.0
        %1249 = vmatprep.subr.mxu0 0.0
        %1250 = vmatpush1.msra.mxu0 0.0
        %1251 = vmatprep.subr.mxu0 0.0
        %1252 = vmatpush1.msra.mxu0 0.0
        %1253 = vmatprep.subr.mxu0 0.0
        %1254 = vmatpush1.msra.mxu0 0.0
        %1255 = vmatprep.subr.mxu0 0.0
        %1256 = vmatpush1.msra.mxu0 0.0
        %1257 = vmatprep.subr.mxu0 0.0
        %1258 = vmatpush1.msra.mxu0 0.0
        %1259 = vmatprep.subr.mxu0 0.0
        %1260 = vmatpush1.msra.mxu0 0.0
        %1261 = vmatprep.subr.mxu0 0.0
        %1262 = vmatpush1.msra.mxu0 0.0
        %1263 = vmatprep.subr.mxu0 0.0
        %1264 = vmatpush1.msra.mxu0 0.0
        %1265 = vmatprep.subr.mxu0 0.0
        %1266 = vmatpush1.msra.mxu0 0.0
        %1267 = vmatprep.subr.mxu0 0.0
        %1268 = vmatpush1.msra.mxu0 0.0
        %1269 = vmatprep.subr.mxu0 0.0
        %1270 = vmatpush1.msra.mxu0 0.0
        %1271 = vmatprep.subr.mxu0 0.0
        %1272 = vmatpush1.msra.mxu0 0.0
        %1273 = vmatprep.subr.mxu0 0.0
        %1274 = vmatpush1.msra.mxu0 0.0
        %1275 = vmatprep.subr.mxu0 0.0
        %1276 = vmatpush1.msra.mxu0 0.0
        %1277 = vmatprep.subr.mxu0 0.0
        %1278 = vmatpush1.msra.mxu0 0.0
        %1279 = vmatprep.subr.mxu0 0.0
        %1280 = vmatpush1.msra.mxu0 0.0
        %1281 = vmatprep.subr.mxu0 0.0
        %1282 = vmatpush1.msra.mxu0 0.0
        %1283 = vmatprep.subr.mxu0 0.0
        %1284 = vmatpush1.msra.mxu0 0.0
        %1285 = vmatprep.subr.mxu0 0.0
        %1286 = vmatpush1.msra.mxu0 0.0
        %1287 = vmatprep.subr.mxu0 0.0
        %1288 = vmatpush1.msra.mxu0 0.0
        %1289 = vmatprep.subr.mxu0 0.0
        %1290 = vmatpush1.msra.mxu0 0.0
        %1291 = vmatprep.subr.mxu0 0.0
        %1292 = vmatpush1.msra.mxu0 0.0
        %1293 = vmatprep.subr.mxu0 0.0
        %1294 = vmatpush1.msra.mxu0 0.0
        %1295 = vmatprep.mubr.f32.mxu0 0.0
        %1296 = vmatmul.mubr.f32.gmra.mrb[0].mxu0 %v1226
        %v1297 = vpop.f32.mrb[0].mxu0
        %v1298 = vadd.f32 0.0, %v1297
        %v1299 = vpop.f32.mrb[0].mxu0
        %1300 = vmatprep.mubr.f32.mxu0 0.0
        %1301 = vmatmul.mubr.f32.gmra.mrb[0].mxu0 %v1229
        %v1302 = vpop.f32.mrb[0].mxu0
        %v1303 = vadd.f32 0.0, %v1302
        %v1304 = vpop.f32.mrb[0].mxu0
        %1305 = vdwg.mxu0
        %v1307 = vsel %vm706, %v668, 0
        %v1310 = vsel %vm706, %v669, 0
        %1312 = vmatprep.subr.mxu0 0.0
        %1313 = vmatpush1.msra.mxu0 %v1223
        %1314 = vmatprep.subr.mxu0 0.0
        %1315 = vmatpush1.msra.mxu0 %v1224
        %1316 = vmatprep.subr.mxu0 0.0
        %1317 = vmatpush1.msra.mxu0 0.0
        %1318 = vmatprep.subr.mxu0 0.0
        %1319 = vmatpush1.msra.mxu0 0.0
        %1320 = vmatprep.subr.mxu0 0.0
        %1321 = vmatpush1.msra.mxu0 0.0
        %1322 = vmatprep.subr.mxu0 0.0
        %1323 = vmatpush1.msra.mxu0 0.0
        %1324 = vmatprep.subr.mxu0 0.0
        %1325 = vmatpush1.msra.mxu0 0.0
        %1326 = vmatprep.subr.mxu0 0.0
        %1327 = vmatpush1.msra.mxu0 0.0
        %1328 = vmatprep.subr.mxu0 0.0
        %1329 = vmatpush1.msra.mxu0 0.0
        %1330 = vmatprep.subr.mxu0 0.0
        %1331 = vmatpush1.msra.mxu0 0.0
        %1332 = vmatprep.subr.mxu0 0.0
        %1333 = vmatpush1.msra.mxu0 0.0
        %1334 = vmatprep.subr.mxu0 0.0
        %1335 = vmatpush1.msra.mxu0 0.0
        %1336 = vmatprep.subr.mxu0 0.0
        %1337 = vmatpush1.msra.mxu0 0.0
        %1338 = vmatprep.subr.mxu0 0.0
        %1339 = vmatpush1.msra.mxu0 0.0
        %1340 = vmatprep.subr.mxu0 0.0
        %1341 = vmatpush1.msra.mxu0 0.0
        %1342 = vmatprep.subr.mxu0 0.0
        %1343 = vmatpush1.msra.mxu0 0.0
        %1344 = vmatprep.subr.mxu0 0.0
        %1345 = vmatpush1.msra.mxu0 0.0
        %1346 = vmatprep.subr.mxu0 0.0
        %1347 = vmatpush1.msra.mxu0 0.0
        %1348 = vmatprep.subr.mxu0 0.0
        %1349 = vmatpush1.msra.mxu0 0.0
        %1350 = vmatprep.subr.mxu0 0.0
        %1351 = vmatpush1.msra.mxu0 0.0
        %1352 = vmatprep.subr.mxu0 0.0
        %1353 = vmatpush1.msra.mxu0 0.0
        %1354 = vmatprep.subr.mxu0 0.0
        %1355 = vmatpush1.msra.mxu0 0.0
        %1356 = vmatprep.subr.mxu0 0.0
        %1357 = vmatpush1.msra.mxu0 0.0
        %1358 = vmatprep.subr.mxu0 0.0
        %1359 = vmatpush1.msra.mxu0 0.0
        %1360 = vmatprep.subr.mxu0 0.0
        %1361 = vmatpush1.msra.mxu0 0.0
        %1362 = vmatprep.subr.mxu0 0.0
        %1363 = vmatpush1.msra.mxu0 0.0
        %1364 = vmatprep.subr.mxu0 0.0
        %1365 = vmatpush1.msra.mxu0 0.0
        %1366 = vmatprep.subr.mxu0 0.0
        %1367 = vmatpush1.msra.mxu0 0.0
        %1368 = vmatprep.subr.mxu0 0.0
        %1369 = vmatpush1.msra.mxu0 0.0
        %1370 = vmatprep.subr.mxu0 0.0
        %1371 = vmatpush1.msra.mxu0 0.0
        %1372 = vmatprep.subr.mxu0 0.0
        %1373 = vmatpush1.msra.mxu0 0.0
        %1374 = vmatprep.subr.mxu0 0.0
        %1375 = vmatpush1.msra.mxu0 0.0
        %1376 = vmatprep.mubr.f32.mxu0 0.0
        %1377 = vmatmul.mubr.f32.gmra.mrb[0].mxu0 %v1307
        %v1378 = vpop.f32.mrb[0].mxu0
        %v1379 = vadd.f32 0.0, %v1378
        %v1380 = vpop.f32.mrb[0].mxu0
        %1381 = vmatprep.mubr.f32.mxu0 0.0
        %1382 = vmatmul.mubr.f32.gmra.mrb[0].mxu0 %v1310
        %v1383 = vpop.f32.mrb[0].mxu0
        %v1384 = vadd.f32 0.0, %v1383
        %v1385 = vpop.f32.mrb[0].mxu0
        %1386 = vdwg.mxu0
        %v1387 = vadd.f32 %v1215, %v1223
        %v1388 = vadd.f32 %v1216, %v1224
        %v1390 = vsel %vm706, %v671, 0
        %v1393 = vsel %vm706, %v672, 0
        %1395 = vmatprep.subr.mxu0 0.0
        %1396 = vmatpush1.msra.mxu0 %v1387
        %1397 = vmatprep.subr.mxu0 0.0
        %1398 = vmatpush1.msra.mxu0 %v1388
        %1399 = vmatprep.subr.mxu0 0.0
        %1400 = vmatpush1.msra.mxu0 0.0
        %1401 = vmatprep.subr.mxu0 0.0
        %1402 = vmatpush1.msra.mxu0 0.0
        %1403 = vmatprep.subr.mxu0 0.0
        %1404 = vmatpush1.msra.mxu0 0.0
        %1405 = vmatprep.subr.mxu0 0.0
        %1406 = vmatpush1.msra.mxu0 0.0
        %1407 = vmatprep.subr.mxu0 0.0
        %1408 = vmatpush1.msra.mxu0 0.0
        %1409 = vmatprep.subr.mxu0 0.0
        %1410 = vmatpush1.msra.mxu0 0.0
        %1411 = vmatprep.subr.mxu0 0.0
        %1412 = vmatpush1.msra.mxu0 0.0
        %1413 = vmatprep.subr.mxu0 0.0
        %1414 = vmatpush1.msra.mxu0 0.0
        %1415 = vmatprep.subr.mxu0 0.0
        %1416 = vmatpush1.msra.mxu0 0.0
        %1417 = vmatprep.subr.mxu0 0.0
        %1418 = vmatpush1.msra.mxu0 0.0
        %1419 = vmatprep.subr.mxu0 0.0
        %1420 = vmatpush1.msra.mxu0 0.0
        %1421 = vmatprep.subr.mxu0 0.0
        %1422 = vmatpush1.msra.mxu0 0.0
        %1423 = vmatprep.subr.mxu0 0.0
        %1424 = vmatpush1.msra.mxu0 0.0
        %1425 = vmatprep.subr.mxu0 0.0
        %1426 = vmatpush1.msra.mxu0 0.0
        %1427 = vmatprep.subr.mxu0 0.0
        %1428 = vmatpush1.msra.mxu0 0.0
        %1429 = vmatprep.subr.mxu0 0.0
        %1430 = vmatpush1.msra.mxu0 0.0
        %1431 = vmatprep.subr.mxu0 0.0
        %1432 = vmatpush1.msra.mxu0 0.0
        %1433 = vmatprep.subr.mxu0 0.0
        %1434 = vmatpush1.msra.mxu0 0.0
        %1435 = vmatprep.subr.mxu0 0.0
        %1436 = vmatpush1.msra.mxu0 0.0
        %1437 = vmatprep.subr.mxu0 0.0
        %1438 = vmatpush1.msra.mxu0 0.0
        %1439 = vmatprep.subr.mxu0 0.0
        %1440 = vmatpush1.msra.mxu0 0.0
        %1441 = vmatprep.subr.mxu0 0.0
        %1442 = vmatpush1.msra.mxu0 0.0
        %1443 = vmatprep.subr.mxu0 0.0
        %1444 = vmatpush1.msra.mxu0 0.0
        %1445 = vmatprep.subr.mxu0 0.0
        %1446 = vmatpush1.msra.mxu0 0.0
        %1447 = vmatprep.subr.mxu0 0.0
        %1448 = vmatpush1.msra.mxu0 0.0
        %1449 = vmatprep.subr.mxu0 0.0
        %1450 = vmatpush1.msra.mxu0 0.0
        %1451 = vmatprep.subr.mxu0 0.0
        %1452 = vmatpush1.msra.mxu0 0.0
        %1453 = vmatprep.subr.mxu0 0.0
        %1454 = vmatpush1.msra.mxu0 0.0
        %1455 = vmatprep.subr.mxu0 0.0
        %1456 = vmatpush1.msra.mxu0 0.0
        %1457 = vmatprep.subr.mxu0 0.0
        %1458 = vmatpush1.msra.mxu0 0.0
        %1459 = vmatprep.mubr.f32.mxu0 0.0
        %1460 = vmatmul.mubr.f32.gmra.mrb[0].mxu0 %v1390
        %v1461 = vpop.f32.mrb[0].mxu0
        %v1462 = vadd.f32 0.0, %v1461
        %v1463 = vpop.f32.mrb[0].mxu0
        %1464 = vmatprep.mubr.f32.mxu0 0.0
        %1465 = vmatmul.mubr.f32.gmra.mrb[0].mxu0 %v1393
        %v1466 = vpop.f32.mrb[0].mxu0
        %v1467 = vadd.f32 0.0, %v1466
        %v1468 = vpop.f32.mrb[0].mxu0
        %1469 = vdwg.mxu0
        %v1470 = vsub.f32 %v1298, %v1379
        %v1471 = vsub.f32 %v1303, %v1384
        %v1472 = vsub.f32 %v1462, %v1298
        %v1473 = vsub.f32 %v1467, %v1303
        %v1474 = vsub.f32 %v1472, %v1379
        %v1475 = vsub.f32 %v1473, %v1384
        %v1477 = vsel %vm706, %v1470, 0
        %v1480 = vsel %vm706, %v1471, 0
        %1482 = vmatprep.subr.mxu0 0.0
        %1483 = vmatpush1.msra.mxu0 %v682
        %1484 = vmatprep.subr.mxu0 0.0
        %1485 = vmatpush1.msra.mxu0 %v683
        %1486 = vmatprep.subr.mxu0 0.0
        %1487 = vmatpush1.msra.mxu0 0.0
        %1488 = vmatprep.subr.mxu0 0.0
        %1489 = vmatpush1.msra.mxu0 0.0
        %1490 = vmatprep.subr.mxu0 0.0
        %1491 = vmatpush1.msra.mxu0 0.0
        %1492 = vmatprep.subr.mxu0 0.0
        %1493 = vmatpush1.msra.mxu0 0.0
        %1494 = vmatprep.subr.mxu0 0.0
        %1495 = vmatpush1.msra.mxu0 0.0
        %1496 = vmatprep.subr.mxu0 0.0
        %1497 = vmatpush1.msra.mxu0 0.0
        %1498 = vmatprep.subr.mxu0 0.0
        %1499 = vmatpush1.msra.mxu0 0.0
        %1500 = vmatprep.subr.mxu0 0.0
        %1501 = vmatpush1.msra.mxu0 0.0
        %1502 = vmatprep.subr.mxu0 0.0
        %1503 = vmatpush1.msra.mxu0 0.0
        %1504 = vmatprep.subr.mxu0 0.0
        %1505 = vmatpush1.msra.mxu0 0.0
        %1506 = vmatprep.subr.mxu0 0.0
        %1507 = vmatpush1.msra.mxu0 0.0
        %1508 = vmatprep.subr.mxu0 0.0
        %1509 = vmatpush1.msra.mxu0 0.0
        %1510 = vmatprep.subr.mxu0 0.0
        %1511 = vmatpush1.msra.mxu0 0.0
        %1512 = vmatprep.subr.mxu0 0.0
        %1513 = vmatpush1.msra.mxu0 0.0
        %1514 = vmatprep.subr.mxu0 0.0
        %1515 = vmatpush1.msra.mxu0 0.0
        %1516 = vmatprep.subr.mxu0 0.0
        %1517 = vmatpush1.msra.mxu0 0.0
        %1518 = vmatprep.subr.mxu0 0.0
        %1519 = vmatpush1.msra.mxu0 0.0
        %1520 = vmatprep.subr.mxu0 0.0
        %1521 = vmatpush1.msra.mxu0 0.0
        %1522 = vmatprep.subr.mxu0 0.0
        %1523 = vmatpush1.msra.mxu0 0.0
        %1524 = vmatprep.subr.mxu0 0.0
        %1525 = vmatpush1.msra.mxu0 0.0
        %1526 = vmatprep.subr.mxu0 0.0
        %1527 = vmatpush1.msra.mxu0 0.0
        %1528 = vmatprep.subr.mxu0 0.0
        %1529 = vmatpush1.msra.mxu0 0.0
        %1530 = vmatprep.subr.mxu0 0.0
        %1531 = vmatpush1.msra.mxu0 0.0
        %1532 = vmatprep.subr.mxu0 0.0
        %1533 = vmatpush1.msra.mxu0 0.0
        %1534 = vmatprep.subr.mxu0 0.0
        %1535 = vmatpush1.msra.mxu0 0.0
        %1536 = vmatprep.subr.mxu0 0.0
        %1537 = vmatpush1.msra.mxu0 0.0
        %1538 = vmatprep.subr.mxu0 0.0
        %1539 = vmatpush1.msra.mxu0 0.0
        %1540 = vmatprep.subr.mxu0 0.0
        %1541 = vmatpush1.msra.mxu0 0.0
        %1542 = vmatprep.subr.mxu0 0.0
        %1543 = vmatpush1.msra.mxu0 0.0
        %1544 = vmatprep.subr.mxu0 0.0
        %1545 = vmatpush1.msra.mxu0 0.0
        %1546 = vmatprep.mubr.f32.mxu0 0.0
        %1547 = vmatmul.mubr.f32.gmra.mrb[0].mxu0 %v1477
        %v1548 = vpop.f32.mrb[0].mxu0
        %v1549 = vadd.f32 0.0, %v1548
        %v1550 = vpop.f32.mrb[0].mxu0
        %1551 = vmatprep.mubr.f32.mxu0 0.0
        %1552 = vmatmul.mubr.f32.gmra.mrb[0].mxu0 %v1480
        %v1553 = vpop.f32.mrb[0].mxu0
        %v1554 = vadd.f32 0.0, %v1553
        %v1555 = vpop.f32.mrb[0].mxu0
        %1556 = vdwg.mxu0
        %v1558 = vsel %vm706, %v1474, 0
        %v1561 = vsel %vm706, %v1475, 0
        %1563 = vmatprep.subr.mxu0 0.0
        %1564 = vmatpush1.msra.mxu0 %v685
        %1565 = vmatprep.subr.mxu0 0.0
        %1566 = vmatpush1.msra.mxu0 %v686
        %1567 = vmatprep.subr.mxu0 0.0
        %1568 = vmatpush1.msra.mxu0 0.0
        %1569 = vmatprep.subr.mxu0 0.0
        %1570 = vmatpush1.msra.mxu0 0.0
        %1571 = vmatprep.subr.mxu0 0.0
        %1572 = vmatpush1.msra.mxu0 0.0
        %1573 = vmatprep.subr.mxu0 0.0
        %1574 = vmatpush1.msra.mxu0 0.0
        %1575 = vmatprep.subr.mxu0 0.0
        %1576 = vmatpush1.msra.mxu0 0.0
        %1577 = vmatprep.subr.mxu0 0.0
        %1578 = vmatpush1.msra.mxu0 0.0
        %1579 = vmatprep.subr.mxu0 0.0
        %1580 = vmatpush1.msra.mxu0 0.0
        %1581 = vmatprep.subr.mxu0 0.0
        %1582 = vmatpush1.msra.mxu0 0.0
        %1583 = vmatprep.subr.mxu0 0.0
        %1584 = vmatpush1.msra.mxu0 0.0
        %1585 = vmatprep.subr.mxu0 0.0
        %1586 = vmatpush1.msra.mxu0 0.0
        %1587 = vmatprep.subr.mxu0 0.0
        %1588 = vmatpush1.msra.mxu0 0.0
        %1589 = vmatprep.subr.mxu0 0.0
        %1590 = vmatpush1.msra.mxu0 0.0
        %1591 = vmatprep.subr.mxu0 0.0
        %1592 = vmatpush1.msra.mxu0 0.0
        %1593 = vmatprep.subr.mxu0 0.0
        %1594 = vmatpush1.msra.mxu0 0.0
        %1595 = vmatprep.subr.mxu0 0.0
        %1596 = vmatpush1.msra.mxu0 0.0
        %1597 = vmatprep.subr.mxu0 0.0
        %1598 = vmatpush1.msra.mxu0 0.0
        %1599 = vmatprep.subr.mxu0 0.0
        %1600 = vmatpush1.msra.mxu0 0.0
        %1601 = vmatprep.subr.mxu0 0.0
        %1602 = vmatpush1.msra.mxu0 0.0
        %1603 = vmatprep.subr.mxu0 0.0
        %1604 = vmatpush1.msra.mxu0 0.0
        %1605 = vmatprep.subr.mxu0 0.0
        %1606 = vmatpush1.msra.mxu0 0.0
        %1607 = vmatprep.subr.mxu0 0.0
        %1608 = vmatpush1.msra.mxu0 0.0
        %1609 = vmatprep.subr.mxu0 0.0
        %1610 = vmatpush1.msra.mxu0 0.0
        %1611 = vmatprep.subr.mxu0 0.0
        %1612 = vmatpush1.msra.mxu0 0.0
        %1613 = vmatprep.subr.mxu0 0.0
        %1614 = vmatpush1.msra.mxu0 0.0
        %1615 = vmatprep.subr.mxu0 0.0
        %1616 = vmatpush1.msra.mxu0 0.0
        %1617 = vmatprep.subr.mxu0 0.0
        %1618 = vmatpush1.msra.mxu0 0.0
        %1619 = vmatprep.subr.mxu0 0.0
        %1620 = vmatpush1.msra.mxu0 0.0
        %1621 = vmatprep.subr.mxu0 0.0
        %1622 = vmatpush1.msra.mxu0 0.0
        %1623 = vmatprep.subr.mxu0 0.0
        %1624 = vmatpush1.msra.mxu0 0.0
        %1625 = vmatprep.subr.mxu0 0.0
        %1626 = vmatpush1.msra.mxu0 0.0
        %1627 = vmatprep.mubr.f32.mxu0 0.0
        %1628 = vmatmul.mubr.f32.gmra.mrb[0].mxu0 %v1558
        %v1629 = vpop.f32.mrb[0].mxu0
        %v1630 = vadd.f32 0.0, %v1629
        %v1631 = vpop.f32.mrb[0].mxu0
        %1632 = vmatprep.mubr.f32.mxu0 0.0
        %1633 = vmatmul.mubr.f32.gmra.mrb[0].mxu0 %v1561
        %v1634 = vpop.f32.mrb[0].mxu0
        %v1635 = vadd.f32 0.0, %v1634
        %v1636 = vpop.f32.mrb[0].mxu0
        %1637 = vdwg.mxu0
        %v1638 = vadd.f32 %v1470, %v1474
        %v1639 = vadd.f32 %v1471, %v1475
        %v1641 = vsel %vm706, %v1638, 0
        %v1644 = vsel %vm706, %v1639, 0
        %1646 = vmatprep.subr.mxu0 0.0
        %1647 = vmatpush1.msra.mxu0 %v688
        %1648 = vmatprep.subr.mxu0 0.0
        %1649 = vmatpush1.msra.mxu0 %v689
        %1650 = vmatprep.subr.mxu0 0.0
        %1651 = vmatpush1.msra.mxu0 0.0
        %1652 = vmatprep.subr.mxu0 0.0
        %1653 = vmatpush1.msra.mxu0 0.0
        %1654 = vmatprep.subr.mxu0 0.0
        %1655 = vmatpush1.msra.mxu0 0.0
        %1656 = vmatprep.subr.mxu0 0.0
        %1657 = vmatpush1.msra.mxu0 0.0
        %1658 = vmatprep.subr.mxu0 0.0
        %1659 = vmatpush1.msra.mxu0 0.0
        %1660 = vmatprep.subr.mxu0 0.0
        %1661 = vmatpush1.msra.mxu0 0.0
        %1662 = vmatprep.subr.mxu0 0.0
        %1663 = vmatpush1.msra.mxu0 0.0
        %1664 = vmatprep.subr.mxu0 0.0
        %1665 = vmatpush1.msra.mxu0 0.0
        %1666 = vmatprep.subr.mxu0 0.0
        %1667 = vmatpush1.msra.mxu0 0.0
        %1668 = vmatprep.subr.mxu0 0.0
        %1669 = vmatpush1.msra.mxu0 0.0
        %1670 = vmatprep.subr.mxu0 0.0
        %1671 = vmatpush1.msra.mxu0 0.0
        %1672 = vmatprep.subr.mxu0 0.0
        %1673 = vmatpush1.msra.mxu0 0.0
        %1674 = vmatprep.subr.mxu0 0.0
        %1675 = vmatpush1.msra.mxu0 0.0
        %1676 = vmatprep.subr.mxu0 0.0
        %1677 = vmatpush1.msra.mxu0 0.0
        %1678 = vmatprep.subr.mxu0 0.0
        %1679 = vmatpush1.msra.mxu0 0.0
        %1680 = vmatprep.subr.mxu0 0.0
        %1681 = vmatpush1.msra.mxu0 0.0
        %1682 = vmatprep.subr.mxu0 0.0
        %1683 = vmatpush1.msra.mxu0 0.0
        %1684 = vmatprep.subr.mxu0 0.0
        %1685 = vmatpush1.msra.mxu0 0.0
        %1686 = vmatprep.subr.mxu0 0.0
        %1687 = vmatpush1.msra.mxu0 0.0
        %1688 = vmatprep.subr.mxu0 0.0
        %1689 = vmatpush1.msra.mxu0 0.0
        %1690 = vmatprep.subr.mxu0 0.0
        %1691 = vmatpush1.msra.mxu0 0.0
        %1692 = vmatprep.subr.mxu0 0.0
        %1693 = vmatpush1.msra.mxu0 0.0
        %1694 = vmatprep.subr.mxu0 0.0
        %1695 = vmatpush1.msra.mxu0 0.0
        %1696 = vmatprep.subr.mxu0 0.0
        %1697 = vmatpush1.msra.mxu0 0.0
        %1698 = vmatprep.subr.mxu0 0.0
        %1699 = vmatpush1.msra.mxu0 0.0
        %1700 = vmatprep.subr.mxu0 0.0
        %1701 = vmatpush1.msra.mxu0 0.0
        %1702 = vmatprep.subr.mxu0 0.0
        %1703 = vmatpush1.msra.mxu0 0.0
        %1704 = vmatprep.subr.mxu0 0.0
        %1705 = vmatpush1.msra.mxu0 0.0
        %1706 = vmatprep.subr.mxu0 0.0
        %1707 = vmatpush1.msra.mxu0 0.0
        %1708 = vmatprep.subr.mxu0 0.0
        %1709 = vmatpush1.msra.mxu0 0.0
        %1710 = vmatprep.mubr.f32.mxu0 0.0
        %1711 = vmatmul.mubr.f32.gmra.mrb[0].mxu0 %v1641
        %v1712 = vpop.f32.mrb[0].mxu0
        %v1713 = vadd.f32 0.0, %v1712
        %v1714 = vpop.f32.mrb[0].mxu0
        %1715 = vmatprep.mubr.f32.mxu0 0.0
        %1716 = vmatmul.mubr.f32.gmra.mrb[0].mxu0 %v1644
        %v1717 = vpop.f32.mrb[0].mxu0
        %v1718 = vadd.f32 0.0, %v1717
        %v1719 = vpop.f32.mrb[0].mxu0
        %1720 = vdwg.mxu0
        %v1721 = vsub.f32 %v1549, %v1630
        %v1722 = vsub.f32 %v1554, %v1635
        %v1723 = vsub.f32 %v1713, %v1549
        %v1724 = vsub.f32 %v1718, %v1554
        %v1725 = vsub.f32 %v1723, %v1630
        %v1726 = vsub.f32 %v1724, %v1635
        %v1727 = vld [vmem:[#allocation2] sm:$0xff]
        %v1728 = vld [vmem:[#allocation2 + $0x8] sm:$0xff]
        %v1729 = vmul.f32 %v690, %v1721
        %v1730 = vmul.f32 %v691, %v1722
        %v1731 = vmul.f32 %v692, %v1725
        %v1732 = vmul.f32 %v693, %v1726
        %v1733 = vadd.f32 %v1729, %v1731
        %v1734 = vadd.f32 %v1730, %v1732
        %v1735 = vadd.f32 %v1727, %v1733
        %v1736 = vadd.f32 %v1728, %v1734
        %1737 = vst.msk [vmem:[#allocation2] sm:$0xff] %vm706, %v1735
        %1738 = vst.msk [vmem:[#allocation2 + $0x8] sm:$0xff] %vm706, %v1736
        %v1739 = vld [vmem:[#allocation3] sm:$0xff]
        %v1740 = vld [vmem:[#allocation3 + $0x8] sm:$0xff]
        %v1741 = vmul.f32 %v690, %v1725
        %v1742 = vmul.f32 %v691, %v1726
        %v1743 = vmul.f32 %v692, %v1721
        %v1744 = vmul.f32 %v693, %v1722
        %v1745 = vsub.f32 %v1741, %v1743
        %v1746 = vsub.f32 %v1742, %v1744
        %v1747 = vadd.f32 %v1739, %v1745
        %v1748 = vadd.f32 %v1740, %v1746
        %1749 = vst.msk [vmem:[#allocation3] sm:$0xff] %vm706, %v1747
        %1750 = vst.msk [vmem:[#allocation3 + $0x8] sm:$0xff] %vm706, %v1748
        %p1751 = scmp.eq.s32.totalorder %s41, 3
        // Predicated region
        $region97: #{tpu_custom_call.1} parent=55 // pred_check
          %p1752 = pneg %p1751
        $region98: #{tpu_custom_call.1} parent=55 // pred_check_branch
          %1754 = sbr.rel (%p1752) target = $region100
        $region99: #{tpu_custom_call.1} parent=55 // pred_region
          %v1755 = vld [vmem:[#allocation2] sm:$0xff]
          %v1756 = vld [vmem:[#allocation2 + $0x8] sm:$0xff]
          %v1757 = vadd.f32 %v648, %v1755
          %v1758 = vadd.f32 %v649, %v1756
          %1759 = vst.msk [vmem:[%s638] sm:$0xff] %vm706, %v1757
          %1760 = vst.msk [vmem:[%s638 + $0x8] sm:$0xff] %vm706, %v1758
          %v1761 = vld [vmem:[#allocation3] sm:$0xff]
          %v1762 = vld [vmem:[#allocation3 + $0x8] sm:$0xff]
          %v1763 = vadd.f32 %v650, %v1761
          %v1764 = vadd.f32 %v651, %v1762
          %s1765 = scalar_lea.vmem %s638, 16 [#allocation19]
          %1766 = vst.msk [vmem:[%s1765] sm:$0xff] %vm706, %v1763
          %1767 = vst.msk [vmem:[%s1765 + $0x8] sm:$0xff] %vm706, %v1764
        $region100: #{tpu_custom_call.1} parent=55 // pred_fallthru
          _
        %s1768 = sand.u32 %s288, 1
        %s1769 = scalar_lea.sflag [#allocation6], %s1768
        %s1770 = sand.u32 %s288, 1
        %s1771 = smul.addr %s1770, 32
        %s1772 = scalar_lea.vmem [#allocation19], %s1771
        // Predicated region
        $region101: #{tpu_custom_call.1} parent=55 // pred_check
          %p1773 = pneg %p298
        $region102: #{tpu_custom_call.1} parent=55 // pred_check_branch
          %1775 = sbr.rel (%p1773) target = $region104
        $region103: #{tpu_custom_call.1} parent=55 // pred_region
          %s1777 = ssub.s32 512, 512
          %1778 = vsyncadd %s1769, %s1777
          %s1779 = smul.addr %s40, 4
          %s1780 = smul.addr %s1779, 128
          %s1781 = scalar_lea.hbm %s9, %s1780
          %s1782 = sshll.u32 %s1772, 4
          %s1783 = int_to_ptr.vmem [resolvable:$true] %s1782
          %1788 = dma.vmem_to_hbm [thread:$0]  %s1783, 512, %s1781, %s1769, 128, 128, 8
        $region104: #{tpu_custom_call.1} parent=55 // pred_fallthru
          _
      $region56: #{tpu_custom_call.1} parent=5 // pred_fallthru
        _
      %p1789 = scmp.le.s32.totalorder 2, %s31
      // Predicated region
      $region105: #{tpu_custom_call.1} parent=5 // pred_check
        %p1790 = pneg %p1789
      $region106: #{tpu_custom_call.1} parent=5 // pred_check_branch
        %1792 = sbr.rel (%p1790) target = $region108
      $region107: #{tpu_custom_call.1} parent=5 // pred_region
        %s1793 = ssub.s32 %s31, 2
        // Predicated region
        $region109: #{tpu_custom_call.1} parent=107 // pred_check
          %p1794 = pneg %p304
        $region110: #{tpu_custom_call.1} parent=107 // pred_check_branch
          %1796 = sbr.rel (%p1794) target = $region112
        $region111: #{tpu_custom_call.1} parent=107 // pred_region
          %s1797 = sand.u32 %s289, 1
          %s1798 = scalar_lea.sflag [#allocation6], %s1797
          %s1799 = sand.u32 %s289, 1
          %s1800 = smul.addr %s1799, 32
          %s1801 = scalar_lea.vmem [#allocation19], %s1800
          %1802 = dma.done %s1798, 512
        $region112: #{tpu_custom_call.1} parent=107 // pred_fallthru
          _
      $region108: #{tpu_custom_call.1} parent=5 // pred_fallthru
        _
    $region6: #{tpu_custom_call.1} parent=1 // loop_footer
      %s35 = sadd.s32 1, %s31
    $region7: #{tpu_custom_call.1} parent=1 // loop_footer_branch
      %30 = sbr.rel target = $region3
    $region8: #{tpu_custom_call.1} parent=1 // loop_exit
      _
    %1803 = vsyncpa [#allocation5], 1
    %s1804 = scalar_lea.sflag [#allocation5], 1
    %1805 = vsyncpa %s1804, 1
    %1806 = vsyncpa [#allocation8], 1
    %s1807 = scalar_lea.sflag [#allocation8], 1
    %1808 = vsyncpa %s1807, 1
    %1809 = vsyncpa [#allocation11], 1
    %s1810 = scalar_lea.sflag [#allocation11], 1
    %1811 = vsyncpa %s1810, 1
    %1812 = vsyncpa [#allocation14], 1
    %s1813 = scalar_lea.sflag [#allocation14], 1
    %1814 = vsyncpa %s1813, 1
    %1815 = vsyncpa [#allocation17], 1
    %1816 = vsyncpa [#allocation6], 1
    %s1817 = scalar_lea.sflag [#allocation6], 1
    %1818 = vsyncpa %s1817, 1

</llo_original>
